<compile_context>
chip_gen: v7x
topology: tpu7x:2x2x1
jax: 0.10.0
libtpu: 0.0.40
codegen_flags: <defaults>
</compile_context>

<pallas_src>
import jax
import jax.numpy as jnp
from jax import lax
from jax.experimental import pallas as pl
from jax.experimental.pallas import tpu as pltpu


def _round_up(x, m):
  return (x + m - 1) // m * m


# ----------------------------------------------------------------------------
# Pallas kernels: tiled matmul with fused (scale, shift, residual, relu) epilogue
# ----------------------------------------------------------------------------
def _epilogue(acc, s, t, r, relu):
  out = acc * s + t                      # per-output-channel affine (bias + BN)
  if r is not None:
    out = out + r.astype(jnp.float32)    # residual add in f32
  if relu:
    out = jnp.maximum(out, 0.0)
  return out


def _make_single_k_kernel(relu, has_res):
  """Whole reduction dim in one tile: no accumulator scratch / k-loop needed."""
  if has_res:
    def kernel(a_ref, b_ref, s_ref, t_ref, r_ref, o_ref):
      acc = jnp.dot(a_ref[...], b_ref[...], preferred_element_type=jnp.float32)
      o_ref[...] = _epilogue(acc, s_ref[...], t_ref[...], r_ref[...],
                             relu).astype(o_ref.dtype)
  else:
    def kernel(a_ref, b_ref, s_ref, t_ref, o_ref):
      acc = jnp.dot(a_ref[...], b_ref[...], preferred_element_type=jnp.float32)
      o_ref[...] = _epilogue(acc, s_ref[...], t_ref[...], None,
                             relu).astype(o_ref.dtype)
  return kernel


def _make_multi_k_kernel(relu, has_res):
  """K split across the innermost grid axis: accumulate in VMEM scratch."""
  if has_res:
    def kernel(a_ref, b_ref, s_ref, t_ref, r_ref, o_ref, acc_ref):
      @pl.when(pl.program_id(2) == 0)
      def _():
        acc_ref[...] = jnp.zeros_like(acc_ref)
      acc_ref[...] += jnp.dot(a_ref[...], b_ref[...],
                              preferred_element_type=jnp.float32)

      @pl.when(pl.program_id(2) == pl.num_programs(2) - 1)
      def _():
        o_ref[...] = _epilogue(acc_ref[...], s_ref[...], t_ref[...],
                               r_ref[...], relu).astype(o_ref.dtype)
  else:
    def kernel(a_ref, b_ref, s_ref, t_ref, o_ref, acc_ref):
      @pl.when(pl.program_id(2) == 0)
      def _():
        acc_ref[...] = jnp.zeros_like(acc_ref)
      acc_ref[...] += jnp.dot(a_ref[...], b_ref[...],
                              preferred_element_type=jnp.float32)

      @pl.when(pl.program_id(2) == pl.num_programs(2) - 1)
      def _():
        o_ref[...] = _epilogue(acc_ref[...], s_ref[...], t_ref[...],
                               None, relu).astype(o_ref.dtype)
  return kernel


# ----------------------------------------------------------------------------
# Fused matmul wrapper (adaptive tiling) + one-time weight packing
# ----------------------------------------------------------------------------
def _choose_n_tiling(N):
  """Output-channel (lane) tiling: padded N and tile TN (multiple of 128)."""
  Np = _round_up(N, 128)
  if Np <= 256:
    return Np, Np
  TN = 256
  return _round_up(N, TN), TN


def prep_matmul_weights(w_mat, scale, shift):
  """Pre-pack one fused conv/linear layer: bf16 weight matrix padded to tile
  boundaries + f32 BN-folded (scale, shift) row vectors.  Done once at init."""
  K, N = w_mat.shape
  Kp = _round_up(K, 128)
  Np, _ = _choose_n_tiling(N)
  b_p = jnp.pad(w_mat.astype(jnp.bfloat16), ((0, Kp - K), (0, Np - N)))
  s_p = jnp.pad(scale.astype(jnp.float32).reshape(1, N), ((0, 0), (0, Np - N)))
  t_p = jnp.pad(shift.astype(jnp.float32).reshape(1, N), ((0, 0), (0, Np - N)))
  return {"b": b_p, "s": s_p, "t": t_p, "K": K, "N": N}


def fused_matmul(a, wp, residual=None, relu=False, out_dtype=jnp.bfloat16):
  """out[:M,:N] = relu_opt((a @ W) * scale + shift [+ residual]) via one Pallas
  kernel.  `wp` is the pre-packed dict from prep_matmul_weights."""
  M, K = a.shape
  assert K == wp["K"], (K, wp["K"])
  b_p, s_p, t_p = wp["b"], wp["s"], wp["t"]
  Kp, Np = b_p.shape
  N = wp["N"]

  # --- adaptive tiling -------------------------------------------------------
  # M: single 16-aligned tile for the small late-stage layers, 512-row tiles
  # for the big early-stage layers (keeps padding waste and step overhead low).
  Mp16 = _round_up(M, 16)
  if Mp16 <= 512:
    TM, Mp = Mp16, Mp16
  else:
    TM = 512
    Mp = _round_up(M, TM)
  # K: whole reduction dim in one tile whenever it fits comfortably in VMEM
  # (true for every conv layer); otherwise (final FC) split into 2048 chunks.
  if Kp <= 4608:
    TK = Kp
  elif Kp % 2048 == 0:
    TK = 2048
  elif Kp % 512 == 0:
    TK = 512
  else:
    TK = 128
  TN = Np if Np <= 256 else 256

  # --- operand prep (bf16 inputs, f32 accumulate in-kernel) ------------------
  a_p = a.astype(jnp.bfloat16)
  if (Mp, Kp) != (M, K):
    a_p = jnp.pad(a_p, ((0, Mp - M), (0, Kp - K)))

  has_res = residual is not None
  args = [a_p, b_p, s_p, t_p]
  in_specs = [
      pl.BlockSpec((TM, TK), lambda i, j, k: (i, k)),
      pl.BlockSpec((TK, TN), lambda i, j, k: (k, j)),
      pl.BlockSpec((1, TN), lambda i, j, k: (0, j)),
      pl.BlockSpec((1, TN), lambda i, j, k: (0, j)),
  ]
  if has_res:
    r_p = residual.astype(jnp.bfloat16)
    if r_p.shape != (Mp, Np):
      r_p = jnp.pad(r_p, ((0, Mp - r_p.shape[0]), (0, Np - r_p.shape[1])))
    args.append(r_p)
    in_specs.append(pl.BlockSpec((TM, TN), lambda i, j, k: (i, j)))

  gm, gn, gk = Mp // TM, Np // TN, Kp // TK
  if gk == 1:
    kernel = _make_single_k_kernel(relu, has_res)
    scratch = []
  else:
    kernel = _make_multi_k_kernel(relu, has_res)
    scratch = [pltpu.VMEM((TM, TN), jnp.float32)]

  out_itemsize = jnp.dtype(out_dtype).itemsize
  bytes_accessed = (Mp * Kp * 2 + Kp * Np * 2 + 2 * Np * 4
                    + Mp * Np * out_itemsize + (Mp * Np * 2 if has_res else 0))
  cost = pl.CostEstimate(flops=2 * M * N * K, transcendentals=0,
                         bytes_accessed=int(bytes_accessed))

  out = pl.pallas_call(
      kernel,
      out_shape=jax.ShapeDtypeStruct((Mp, Np), out_dtype),
      grid_spec=pltpu.PrefetchScalarGridSpec(
          num_scalar_prefetch=0,
          grid=(gm, gn, gk),
          in_specs=in_specs,
          out_specs=pl.BlockSpec((TM, TN), lambda i, j, k: (i, j)),
          scratch_shapes=scratch),
      compiler_params=pltpu.CompilerParams(
          dimension_semantics=("parallel", "parallel", "arbitrary")),
      cost_estimate=cost,
  )(*args)
  if (Mp, Np) != (M, N):
    out = out[:M, :N]
  return out


# ----------------------------------------------------------------------------
# Conv / BN / ReLU via im2col + fused Pallas matmul
# ----------------------------------------------------------------------------
def _im2col(x, kh, kw, stride, pad):
  """x: NHWC -> (B*Ho*Wo, kh*kw*C); patch feature ordering = (kh, kw, C)."""
  B, H, W, C = x.shape
  if pad > 0:
    x = jnp.pad(x, ((0, 0), (pad, pad), (pad, pad), (0, 0)))
  Ho = (H + 2 * pad - kh) // stride + 1
  Wo = (W + 2 * pad - kw) // stride + 1
  if kh == 1 and kw == 1 and stride == 1:
    # pointwise conv: im2col is a free reshape, no HBM duplication
    return x.reshape(B * Ho * Wo, C), (B, Ho, Wo)
  cols = []
  for i in range(kh):
    for j in range(kw):
      cols.append(x[:, i:i + stride * Ho:stride, j:j + stride * Wo:stride, :])
  patches = jnp.concatenate(cols, axis=-1)        # (B, Ho, Wo, kh*kw*C)
  return patches.reshape(B * Ho * Wo, kh * kw * C), (B, Ho, Wo)


def conv_bn_act(x, layer, stride, pad, relu=True, residual=None,
                out_dtype=jnp.bfloat16):
  """PyTorch-semantics Conv2d (+ folded BN) (+ residual) (+ ReLU) on NHWC x."""
  kh, kw = layer["kh"], layer["kw"]
  cols, (B, Ho, Wo) = _im2col(x, kh, kw, stride, pad)
  res_mat = None
  if residual is not None:
    res_mat = residual.reshape(B * Ho * Wo, residual.shape[-1])
  out = fused_matmul(cols, layer, residual=res_mat, relu=relu,
                     out_dtype=out_dtype)
  return out.reshape(B, Ho, Wo, layer["N"])


def residual2d(x, p, stride):
  """Residual2d.forward (NHWC activations)."""
  out = conv_bn_act(x, p["c1"], stride, 0, relu=True)
  k = p["c2"]["kh"]
  out = conv_bn_act(out, p["c2"], 1, (k - 1) // 2, relu=True)
  if p["cd"] is not None:
    ident = conv_bn_act(x, p["cd"], stride, 0, relu=False)
  else:
    ident = x
  # conv3 + BN + residual add + ReLU all fused in the kernel epilogue.
  return conv_bn_act(out, p["c3"], 1, 0, relu=True, residual=ident)


# ----------------------------------------------------------------------------
# Deterministic synthetic parameters (shapes per DummyResNet.__init__),
# pre-packed for the fused kernel (BN folded, weights transposed + bf16 + padded)
# ----------------------------------------------------------------------------
def _init_conv(key, out_c, in_c, kh, kw):
  k1, k2 = jax.random.split(key)
  fan_in = in_c * kh * kw
  w = jax.random.normal(k1, (out_c, in_c, kh, kw), jnp.float32) / jnp.sqrt(fan_in)
  b = 0.01 * jax.random.normal(k2, (out_c,), jnp.float32)
  return w, b


def _init_bn(key, c):
  k1, k2 = jax.random.split(key)
  gamma = 1.0 + 0.01 * jax.random.normal(k1, (c,), jnp.float32)
  beta = 0.01 * jax.random.normal(k2, (c,), jnp.float32)
  mean = jnp.zeros((c,), jnp.float32)
  var = jnp.ones((c,), jnp.float32)
  return gamma, beta, mean, var


def _prep_conv(key, out_c, in_c, kh, kw, with_bn, bn_key=None):
  w, b = _init_conv(key, out_c, in_c, kh, kw)
  if with_bn:
    gamma, beta, mean, var = _init_bn(bn_key, out_c)
    s = gamma / jnp.sqrt(var + 1e-5)     # inference-mode BN folded at init time
    t = (b - mean) * s + beta
  else:
    # the DummyResNet downsample conv has no BatchNorm (matches the reference)
    s = jnp.ones((out_c,), jnp.float32)
    t = b
  w_mat = jnp.transpose(w, (2, 3, 1, 0)).reshape(kh * kw * in_c, out_c)
  layer = prep_matmul_weights(w_mat, s, t)
  layer["kh"] = kh
  layer["kw"] = kw
  return layer


_BLOCK_CFG = [
    # (name, in_c, mid_c, out_c, stride, downsample)
    ("conv_block2", 64, 64, 256, 1, True),
    ("identity21", 256, 64, 256, 1, False),
    ("identity22", 256, 64, 256, 1, False),
    ("conv_block3", 256, 128, 512, 2, True),
    ("identity31", 512, 128, 512, 1, False),
    ("identity32", 512, 128, 512, 1, False),
    ("identity33", 512, 128, 512, 1, False),
    ("conv_block4", 512, 256, 1024, 2, True),
    ("identity41", 1024, 256, 1024, 1, False),
    ("identity42", 1024, 256, 1024, 1, False),
    ("identity43", 1024, 256, 1024, 1, False),
    ("identity44", 1024, 256, 1024, 1, False),
    ("identity45", 1024, 256, 1024, 1, False),
    ("conv_block5", 1024, 512, 2048, 2, True),
    ("identity51", 2048, 256, 2048, 1, False),
    ("identity52", 2048, 256, 2048, 1, False),
]


def _init_block(key, in_c, mid_c, out_c, ksize, downsample):
  ks = jax.random.split(key, 8)
  return {
      "c1": _prep_conv(ks[0], mid_c, in_c, 1, 1, True, ks[1]),
      "c2": _prep_conv(ks[2], mid_c, mid_c, ksize, ksize, True, ks[3]),
      "c3": _prep_conv(ks[4], out_c, mid_c, 1, 1, True, ks[5]),
      "cd": _prep_conv(ks[6], out_c, in_c, 1, 1, False) if downsample else None,
  }


def init_params(key):
  ks = iter(jax.random.split(key, 64))
  params = {}
  params["conv1"] = _prep_conv(next(ks), 64, 3, 7, 7, True, next(ks))
  params["blocks"] = []
  for name, in_c, mid_c, out_c, stride, ds in _BLOCK_CFG:
    params["blocks"].append(
        (name, stride, ds, _init_block(next(ks), in_c, mid_c, out_c, 3, ds)))
  kf1, kf2 = jax.random.split(next(ks))
  fc_w = jax.random.normal(
      kf1, (10, 3 * 3 * 2048), jnp.float32) / jnp.sqrt(3 * 3 * 2048)
  fc_b = 0.01 * jax.random.normal(kf2, (10,), jnp.float32)
  params["fc"] = prep_matmul_weights(jnp.transpose(fc_w),
                                     jnp.ones((10,), jnp.float32), fc_b)
  return params


# ----------------------------------------------------------------------------
# DummyResNet.forward
# ----------------------------------------------------------------------------
def dummy_resnet_forward(x_nchw, params):
  # NCHW (PyTorch) -> NHWC bf16 (internal)
  x = jnp.transpose(x_nchw, (0, 2, 3, 1)).astype(jnp.bfloat16)

  # conv1 (7x7, s2, p3) + BN + ReLU fused in the Pallas kernel
  x = conv_bn_act(x, params["conv1"], stride=2, pad=3, relu=True)

  # MaxPool2d(3, 2), padding=0  (glue; tiny vs the conv matmuls)
  x = lax.reduce_window(x, jnp.array(-jnp.inf, x.dtype), lax.max,
                        (1, 3, 3, 1), (1, 2, 2, 1), "VALID")

  # residual stages
  for _, stride, _, p in params["blocks"]:
    x = residual2d(x, p, stride)

  # AvgPool2d(2)  (glue)
  x = lax.reduce_window(x.astype(jnp.float32), 0.0, lax.add,
                        (1, 2, 2, 1), (1, 2, 2, 1), "VALID") / 4.0

  # torch.flatten(x, start_dim=1) on NCHW ordering
  B = x.shape[0]
  x = jnp.transpose(x, (0, 3, 1, 2)).reshape(B, -1)    # (B, 2048*3*3)

  # fc6: y = x @ W.T + b  (same fused Pallas kernel, scale=1, shift=bias)
  return fused_matmul(x, params["fc"], relu=False, out_dtype=jnp.float32)


if __name__ == "__main__":
  root_key = jax.random.PRNGKey(0)
  pkey, xkey = jax.random.split(root_key)
  params = init_params(pkey)

  # The forward pass (fc6 = Linear(3*3*2048, 10)) requires 224x224 inputs.
  x = jax.random.normal(xkey, (1, 3, 224, 224), jnp.float32)

  y = dummy_resnet_forward(x, params)
  y = jax.block_until_ready(y)
  assert y.shape == (1, 10), y.shape
  assert bool(jnp.all(jnp.isfinite(y)))
  print("KERNEL_OK")
</pallas_src>

<mosaic_0001>
module attributes {stable_mosaic.version = 11 : i64} {
  func.func @kernel(%arg0: i32, %arg1: i32, %arg2: i32, %arg3: memref<512x256xbf16, #tpu.memory_space<vmem>>, %arg4: memref<256x128xbf16, #tpu.memory_space<vmem>>, %arg5: memref<1x128xf32, #tpu.memory_space<vmem>>, %arg6: memref<1x128xf32, #tpu.memory_space<vmem>>, %arg7: memref<512x128xbf16, #tpu.memory_space<vmem>>) attributes {dimension_semantics = [#tpu.dimension_semantics<parallel>, #tpu.dimension_semantics<parallel>, #tpu.dimension_semantics<arbitrary>], iteration_bounds = array<i64: 25, 1, 1>, scalar_prefetch = 0 : i64, scratch_operands = 0 : i64, tpu.core_type = #tpu.core_type<tc>, window_params = [{transform_indices = @transform_0, window_bounds = array<i64: 512, 256>}, {transform_indices = @transform_1, window_bounds = array<i64: 256, 128>}, {transform_indices = @transform_2, window_bounds = array<i64: 1, 128>}, {transform_indices = @transform_3, window_bounds = array<i64: 1, 128>}, {transform_indices = @transform_4, window_bounds = array<i64: 512, 128>}]} {
    %c0 = arith.constant 0 : index
    %c0_0 = arith.constant 0 : index
    %0 = vector.load %arg3[%c0, %c0_0] : memref<512x256xbf16, #tpu.memory_space<vmem>>, vector<512x256xbf16>
    %c0_1 = arith.constant 0 : index
    %c0_2 = arith.constant 0 : index
    %1 = vector.load %arg4[%c0_1, %c0_2] : memref<256x128xbf16, #tpu.memory_space<vmem>>, vector<256x128xbf16>
    %cst = arith.constant dense<0.000000e+00> : vector<512x128xf32>
    %2 = tpu.matmul %0, %1, %cst {dimension_numbers = #tpu.dot_dimension_numbers<[1], [0], [0], [1], [0, 0, 1, 1], [], []>} : vector<512x256xbf16>, vector<256x128xbf16>, vector<512x128xf32> -> vector<512x128xf32>
    %c0_3 = arith.constant 0 : index
    %c0_4 = arith.constant 0 : index
    %3 = vector.load %arg5[%c0_3, %c0_4] : memref<1x128xf32, #tpu.memory_space<vmem>>, vector<1x128xf32>
    %c0_5 = arith.constant 0 : index
    %c0_6 = arith.constant 0 : index
    %4 = vector.load %arg6[%c0_5, %c0_6] : memref<1x128xf32, #tpu.memory_space<vmem>>, vector<1x128xf32>
    %5 = vector.broadcast %3 : vector<1x128xf32> to vector<512x128xf32>
    %6 = arith.mulf %2, %5 : vector<512x128xf32>
    %7 = vector.broadcast %4 : vector<1x128xf32> to vector<512x128xf32>
    %8 = arith.addf %6, %7 : vector<512x128xf32>
    %cst_7 = arith.constant 0.000000e+00 : f32
    %9 = vector.broadcast %cst_7 : f32 to vector<512x128xf32>
    %10 = arith.maximumf %8, %9 : vector<512x128xf32>
    %11 = arith.truncf %10 : vector<512x128xf32> to vector<512x128xbf16>
    %c0_8 = arith.constant 0 : index
    %c0_9 = arith.constant 0 : index
    %12 = vector.load %arg7[%c0_8, %c0_9] : memref<512x128xbf16, #tpu.memory_space<vmem>>, vector<512x128xbf16>
    tpu.vector_store %arg7[%c0_8, %c0_9], %11 {strides = array<i32>} : memref<512x128xbf16, #tpu.memory_space<vmem>>, vector<512x128xbf16>,
    return
  }
  func.func @transform_0(%arg0: i32, %arg1: i32, %arg2: i32) -> (i32, i32) {
    %c0_i32 = arith.constant 0 : i32
    return %arg0, %arg2 : i32, i32
  }
  func.func @transform_1(%arg0: i32, %arg1: i32, %arg2: i32) -> (i32, i32) {
    %c0_i32 = arith.constant 0 : i32
    return %arg2, %arg1 : i32, i32
  }
  func.func @transform_2(%arg0: i32, %arg1: i32, %arg2: i32) -> (i32, i32) {
    %c0_i32 = arith.constant 0 : i32
    %c0_i32_0 = arith.constant 0 : i32
    return %c0_i32, %arg1 : i32, i32
  }
  func.func @transform_3(%arg0: i32, %arg1: i32, %arg2: i32) -> (i32, i32) {
    %c0_i32 = arith.constant 0 : i32
    %c0_i32_0 = arith.constant 0 : i32
    return %c0_i32, %arg1 : i32, i32
  }
  func.func @transform_4(%arg0: i32, %arg1: i32, %arg2: i32) -> (i32, i32) {
    %c0_i32 = arith.constant 0 : i32
    return %arg0, %arg1 : i32, i32
  }
}

</mosaic_0001>

<llo_original>
// kernel: tpu_custom_call.1
$region0: #{tpu_custom_call.1}
  #allocation0 [shape = 'u32[]', space=smem, size = 0x4, offset = 0x4, fixed_abs, tag = 'smem constant byte address 0x4 - core index']
  #allocation1 [shape = 'u32[144,128]{1,0:T(1,128)}', space=vmem, size = 0x12000, scoped, tag = 'internal scratch']
  %s0 = inlined_call_operand.hbm [shape: bf16[12800,256], index: 0, kind: input, shape index: {}]
  %s1 = inlined_call_operand.hbm [shape: bf16[256,128], index: 1, kind: input, shape index: {}]
  %s2 = inlined_call_operand.hbm [shape: f32[1,128], index: 2, kind: input, shape index: {}]
  %s3 = inlined_call_operand.hbm [shape: f32[1,128], index: 3, kind: input, shape index: {}]
  %s4 = inlined_call_operand.hbm [shape: bf16[12800,128], index: 4, kind: output, shape index: {}]
  %s5 = sld [smem:[#allocation0]]
  $region65: #{tpu_custom_call.1} parent=0
    _
  %s7 = ssub.s32 1, %s5
  %s8 = scalar_select 0, %s7, %s5
  $region1: #{tpu_custom_call.1} parent=0
    #allocation2 [shape = 'u8[524288]{0}', space=vmem, size = 0x80000, scoped, tag = 'input window, operand 0']
    #allocation3 [shape = 's32[2]{0}', space=sflag, size = 0x8, scoped, tag = 'scoped memory for tpu_custom_call.1']
    #allocation4 [shape = 's32[2]{0}', space=sflag, size = 0x8, scoped, tag = 'scoped memory for tpu_custom_call.1']
    #allocation5 [shape = 'u8[65536]{0}', space=vmem, size = 0x10000, scoped, tag = 'input window, operand 1, single buffered']
    #allocation6 [shape = 's32[1]{0}', space=sflag, size = 0x4, scoped, tag = 'scoped memory for tpu_custom_call.1']
    #allocation7 [shape = 'u8[512]{0}', space=vmem, size = 0x400, scoped, tag = 'input window, operand 2, single buffered']
    #allocation8 [shape = 'u8[512]{0}', space=vmem, size = 0x400, scoped, tag = 'input window, operand 3, single buffered']
    #allocation9 [shape = 's32[1]{0}', space=sflag, size = 0x4, scoped, tag = 'scoped memory for tpu_custom_call.1']
    #allocation10 [shape = 'u8[262144]{0}', space=vmem, size = 0x40000, scoped, tag = 'output window, operand 0']
    %9 = vsyncpa [#allocation3], 0
    %s10 = scalar_lea.sflag [#allocation3], 1
    %11 = vsyncpa %s10, 0
    %12 = vsyncpa [#allocation6], 0
    %13 = vsyncpa [#allocation9], 0
    %14 = vsyncpa [#allocation4], 0
    %s15 = scalar_lea.sflag [#allocation4], 1
    %16 = vsyncpa %s15, 0
    loop: start=0, step=1, limit=27
    $region2: #{tpu_custom_call.1} parent=1 // loop_pre_header
      _
    $region3: #{tpu_custom_call.1} parent=1 // loop_header
      %s18 = sphi 0, %s22
      %p19 = scmp.ge.s32.totalorder %s18, 27
      %s25 = sphi 0, %s44
      %s26 = sphi 0, %s40
      %s27 = sphi 0, %s36
      %s28 = sphi 0, %s25
      %s29 = sphi 0, %s26
      %s30 = sphi 0, %s27
      %s31 = sphi 0, %s28
      %s32 = sphi 0, %s29
      %s33 = sphi 0, %s30
      %s49 = sphi 0, %s51
      %s52 = sphi 0, %s49
      %s53 = sphi 0, %s52
      %s69 = sphi 0, %s53
      %s77 = sphi 0, %s79
      %s80 = sphi 0, %s77
      %s81 = sphi 0, %s80
      %s97 = sphi 0, %s81
      %s103 = sphi 0, %s105
      %s106 = sphi 0, %s103
      %s107 = sphi 0, %s106
      %s123 = sphi 0, %s107
      %s129 = sphi 0, %s131
      %s132 = sphi 0, %s129
      %s133 = sphi 0, %s132
      %s149 = sphi 0, %s133
      %s157 = sphi 0, %s159
      %s160 = sphi 0, %s157
      %s161 = sphi 0, %s160
      %s177 = sphi 0, %s161
    $region4: #{tpu_custom_call.1} parent=1 // loop_header_branch
      %21 = sbr.rel (%p19) target = $region8
    $region5: #{tpu_custom_call.1} parent=1 // loop_body
      %s23 = ssub.s32 %s18, 1
      %s24 = ssub.s32 %s18, 2
      %s34 = sadd.s32 1, %s27
      %p35 = scmp.ge.s32.totalorder %s34, 1
      %s36 = scalar_select %p35, 0, %s34
      %s37 = sadd.s32 1, %s26
      %s38 = scalar_select %p35, %s37, %s26
      %p39 = scmp.ge.s32.totalorder %s38, 1
      %s40 = scalar_select %p39, 0, %s38
      %s41 = sadd.s32 1, %s25
      %s42 = scalar_select %p39, %s41, %s25
      %p43 = scmp.ge.s32.totalorder %s42, 25
      %s44 = scalar_select %p43, 0, %s42
      %s45 = ssub.s32 %s25, %s44
      %s46 = ssub.s32 %s27, %s36
      %s47 = sor.u32 %s45, %s46
      %p48 = scmp.eq.s32.totalorder %s47, 0
      %s50 = sadd.s32 %s49, 1
      %s51 = scalar_select %p48, %s49, %s50
      %p54 = pneg %p48
      %p55 = scmp.eq.s32.totalorder %s18, 24
      %p56 = por %p54, %p55
      %p57 = scmp.ne.s32.totalorder %s49, %s52
      %p58 = scmp.eq.s32.totalorder %s18, 0
      %p59 = por %p57, %p58
      %p60 = scmp.ne.s32.totalorder %s49, %s52
      %p61 = scmp.eq.s32.totalorder %s23, 24
      %p62 = por %p60, %p61
      %p63 = scmp.ne.s32.totalorder %s52, %s53
      %p64 = scmp.eq.s32.totalorder %s23, 0
      %p65 = por %p63, %p64
      %p66 = scmp.ne.s32.totalorder %s52, %s53
      %p67 = scmp.eq.s32.totalorder %s24, 24
      %p68 = por %p66, %p67
      %p70 = scmp.ne.s32.totalorder %s53, %s69
      %p71 = scmp.eq.s32.totalorder %s24, 0
      %p72 = por %p70, %p71
      %s73 = ssub.s32 %s27, %s36
      %s74 = ssub.s32 %s26, %s40
      %s75 = sor.u32 %s73, %s74
      %p76 = scmp.eq.s32.totalorder %s75, 0
      %s78 = sadd.s32 %s77, 1
      %s79 = scalar_select %p76, %s77, %s78
      %p82 = pneg %p76
      %p83 = scmp.eq.s32.totalorder %s18, 24
      %p84 = por %p82, %p83
      %p85 = scmp.ne.s32.totalorder %s77, %s80
      %p86 = scmp.eq.s32.totalorder %s18, 0
      %p87 = por %p85, %p86
      %p88 = scmp.ne.s32.totalorder %s77, %s80
      %p89 = scmp.eq.s32.totalorder %s23, 24
      %p90 = por %p88, %p89
      %p91 = scmp.ne.s32.totalorder %s80, %s81
      %p92 = scmp.eq.s32.totalorder %s23, 0
      %p93 = por %p91, %p92
      %p94 = scmp.ne.s32.totalorder %s80, %s81
      %p95 = scmp.eq.s32.totalorder %s24, 24
      %p96 = por %p94, %p95
      %p98 = scmp.ne.s32.totalorder %s81, %s97
      %p99 = scmp.eq.s32.totalorder %s24, 0
      %p100 = por %p98, %p99
      %s101 = ssub.s32 %s26, %s40
      %p102 = scmp.eq.s32.totalorder %s101, 0
      %s104 = sadd.s32 %s103, 1
      %s105 = scalar_select %p102, %s103, %s104
      %p108 = pneg %p102
      %p109 = scmp.eq.s32.totalorder %s18, 24
      %p110 = por %p108, %p109
      %p111 = scmp.ne.s32.totalorder %s103, %s106
      %p112 = scmp.eq.s32.totalorder %s18, 0
      %p113 = por %p111, %p112
      %p114 = scmp.ne.s32.totalorder %s103, %s106
      %p115 = scmp.eq.s32.totalorder %s23, 24
      %p116 = por %p114, %p115
      %p117 = scmp.ne.s32.totalorder %s106, %s107
      %p118 = scmp.eq.s32.totalorder %s23, 0
      %p119 = por %p117, %p118
      %p120 = scmp.ne.s32.totalorder %s106, %s107
      %p121 = scmp.eq.s32.totalorder %s24, 24
      %p122 = por %p120, %p121
      %p124 = scmp.ne.s32.totalorder %s107, %s123
      %p125 = scmp.eq.s32.totalorder %s24, 0
      %p126 = por %p124, %p125
      %s127 = ssub.s32 %s26, %s40
      %p128 = scmp.eq.s32.totalorder %s127, 0
      %s130 = sadd.s32 %s129, 1
      %s131 = scalar_select %p128, %s129, %s130
      %p134 = pneg %p128
      %p135 = scmp.eq.s32.totalorder %s18, 24
      %p136 = por %p134, %p135
      %p137 = scmp.ne.s32.totalorder %s129, %s132
      %p138 = scmp.eq.s32.totalorder %s18, 0
      %p139 = por %p137, %p138
      %p140 = scmp.ne.s32.totalorder %s129, %s132
      %p141 = scmp.eq.s32.totalorder %s23, 24
      %p142 = por %p140, %p141
      %p143 = scmp.ne.s32.totalorder %s132, %s133
      %p144 = scmp.eq.s32.totalorder %s23, 0
      %p145 = por %p143, %p144
      %p146 = scmp.ne.s32.totalorder %s132, %s133
      %p147 = scmp.eq.s32.totalorder %s24, 24
      %p148 = por %p146, %p147
      %p150 = scmp.ne.s32.totalorder %s133, %s149
      %p151 = scmp.eq.s32.totalorder %s24, 0
      %p152 = por %p150, %p151
      %s153 = ssub.s32 %s25, %s44
      %s154 = ssub.s32 %s26, %s40
      %s155 = sor.u32 %s153, %s154
      %p156 = scmp.eq.s32.totalorder %s155, 0
      %s158 = sadd.s32 %s157, 1
      %s159 = scalar_select %p156, %s157, %s158
      %p162 = pneg %p156
      %p163 = scmp.eq.s32.totalorder %s18, 24
      %p164 = por %p162, %p163
      %p165 = scmp.ne.s32.totalorder %s157, %s160
      %p166 = scmp.eq.s32.totalorder %s18, 0
      %p167 = por %p165, %p166
      %p168 = scmp.ne.s32.totalorder %s157, %s160
      %p169 = scmp.eq.s32.totalorder %s23, 24
      %p170 = por %p168, %p169
      %p171 = scmp.ne.s32.totalorder %s160, %s161
      %p172 = scmp.eq.s32.totalorder %s23, 0
      %p173 = por %p171, %p172
      %p174 = scmp.ne.s32.totalorder %s160, %s161
      %p175 = scmp.eq.s32.totalorder %s24, 24
      %p176 = por %p174, %p175
      %p178 = scmp.ne.s32.totalorder %s161, %s177
      %p179 = scmp.eq.s32.totalorder %s24, 0
      %p180 = por %p178, %p179
      %p181 = scmp.le.s32.totalorder 1, %s18
      %p182 = scmp.lt.s32.totalorder %s18, 26
      %p183 = pnand %p181, %p182
      %p184 = pneg %p183
      // Predicated region
      $region9: #{tpu_custom_call.1} parent=5 // pred_check
        _
      $region10: #{tpu_custom_call.1} parent=5 // pred_check_branch
        %186 = sbr.rel (%p183) target = $region12
      $region11: #{tpu_custom_call.1} parent=5 // pred_region
        %s187 = ssub.s32 %s18, 1
        // Predicated region
        $region13: #{tpu_custom_call.1} parent=11 // pred_check
          %p188 = pneg %p93
        $region14: #{tpu_custom_call.1} parent=11 // pred_check_branch
          %190 = sbr.rel (%p188) target = $region16
        $region15: #{tpu_custom_call.1} parent=11 // pred_region
          %s191 = smul.u32 32, %s30
          %s193 = ssub.s32 2048, 2048
          %194 = vsyncadd [#allocation6], %s193
          %s195 = sadd.s32 %s29, %s191
          %s196 = smul.addr %s195, 64
          %s197 = scalar_lea.hbm %s1, %s196
          %s198 = sshll.u32 [#allocation5], 4
          %s199 = int_to_ptr.vmem [resolvable:$true] %s198
          %204 = dma.hbm_to_vmem [thread:$0]  %s197, 2048, %s199, [#allocation6], 64, 64, 4
        $region16: #{tpu_custom_call.1} parent=11 // pred_fallthru
          _
        // Predicated region
        $region17: #{tpu_custom_call.1} parent=11 // pred_check
          %p205 = pneg %p119
        $region18: #{tpu_custom_call.1} parent=11 // pred_check_branch
          %207 = sbr.rel (%p205) target = $region20
        $region19: #{tpu_custom_call.1} parent=11 // pred_region
          %s209 = ssub.s32 16, 16
          %210 = vsyncadd [#allocation6], %s209
          %s211 = smul.addr %s29, 16
          %s212 = scalar_lea.hbm %s2, %s211
          %s214 = sshll.u32 [#allocation7], 4
          %s215 = int_to_ptr.vmem [resolvable:$true] %s214
          %217 = dma.hbm_to_vmem [thread:$0]  %s212, 16, %s215, [#allocation6]
        $region20: #{tpu_custom_call.1} parent=11 // pred_fallthru
          _
        // Predicated region
        $region21: #{tpu_custom_call.1} parent=11 // pred_check
          %p218 = pneg %p145
        $region22: #{tpu_custom_call.1} parent=11 // pred_check_branch
          %220 = sbr.rel (%p218) target = $region24
        $region23: #{tpu_custom_call.1} parent=11 // pred_region
          %s222 = ssub.s32 16, 16
          %223 = vsyncadd [#allocation9], %s222
          %s224 = smul.addr %s29, 16
          %s225 = scalar_lea.hbm %s3, %s224
          %s227 = sshll.u32 [#allocation8], 4
          %s228 = int_to_ptr.vmem [resolvable:$true] %s227
          %230 = dma.hbm_to_vmem [thread:$0]  %s225, 16, %s228, [#allocation9]
        $region24: #{tpu_custom_call.1} parent=11 // pred_fallthru
          _
      $region12: #{tpu_custom_call.1} parent=5 // pred_fallthru
        _
      %p231 = scmp.lt.s32.totalorder %s18, 25
      // Predicated region
      $region25: #{tpu_custom_call.1} parent=5 // pred_check
        %p232 = pneg %p231
      $region26: #{tpu_custom_call.1} parent=5 // pred_check_branch
        %234 = sbr.rel (%p232) target = $region28
      $region27: #{tpu_custom_call.1} parent=5 // pred_region
        // Predicated region
        $region29: #{tpu_custom_call.1} parent=27 // pred_check
          %p235 = pneg %p59
        $region30: #{tpu_custom_call.1} parent=27 // pred_check_branch
          %237 = sbr.rel (%p235) target = $region32
        $region31: #{tpu_custom_call.1} parent=27 // pred_region
          %s238 = sand.u32 %s49, 1
          %s239 = scalar_lea.sflag [#allocation3], %s238
          %s240 = sand.u32 %s49, 1
          %s241 = smul.addr %s240, 512
          %s242 = scalar_lea.vmem [#allocation2], %s241
          %s243 = smul.u32 64, %s25
          %s244 = smul.u32 2, %s27
          %s246 = ssub.s32 8192, 8192
          %247 = vsyncadd %s239, %s246
          %s248 = smul.addr %s243, 2
          %s249 = sadd.s32 %s244, %s248
          %s250 = smul.addr %s249, 64
          %s251 = scalar_lea.hbm %s0, %s250
          %s252 = sshll.u32 %s242, 4
          %s253 = int_to_ptr.vmem [resolvable:$true] %s252
          %258 = dma.hbm_to_vmem [thread:$0]  %s251, 8192, %s253, %s239, 128, 128, 8
        $region32: #{tpu_custom_call.1} parent=27 // pred_fallthru
          _
      $region28: #{tpu_custom_call.1} parent=5 // pred_fallthru
        _
      %p259 = scmp.le.s32.totalorder 1, %s18
      %p260 = scmp.lt.s32.totalorder %s18, 26
      %p261 = pnand %p259, %p260
      %p262 = pneg %p261
      // Predicated region
      $region33: #{tpu_custom_call.1} parent=5 // pred_check
        _
      $region34: #{tpu_custom_call.1} parent=5 // pred_check_branch
        %264 = sbr.rel (%p261) target = $region36
      $region35: #{tpu_custom_call.1} parent=5 // pred_region
        %s265 = ssub.s32 %s18, 1
        %s266 = sand.u32 %s52, 1
        %s267 = scalar_lea.sflag [#allocation3], %s266
        %s268 = sand.u32 %s52, 1
        %s269 = smul.addr %s268, 512
        %s270 = scalar_lea.vmem [#allocation2], %s269
        // Predicated region
        $region37: #{tpu_custom_call.1} parent=35 // pred_check
          %p271 = pneg %p65
        $region38: #{tpu_custom_call.1} parent=35 // pred_check_branch
          %273 = sbr.rel (%p271) target = $region40
        $region39: #{tpu_custom_call.1} parent=35 // pred_region
          %274 = dma.done %s267, 8192
        $region40: #{tpu_custom_call.1} parent=35 // pred_fallthru
          _
        // Predicated region
        $region41: #{tpu_custom_call.1} parent=35 // pred_check
          %p275 = pneg %p93
        $region42: #{tpu_custom_call.1} parent=35 // pred_check_branch
          %277 = sbr.rel (%p275) target = $region44
        $region43: #{tpu_custom_call.1} parent=35 // pred_region
          %278 = dma.done [#allocation6], 2048
        $region44: #{tpu_custom_call.1} parent=35 // pred_fallthru
          _
        // Predicated region
        $region45: #{tpu_custom_call.1} parent=35 // pred_check
          %p279 = pneg %p119
        $region46: #{tpu_custom_call.1} parent=35 // pred_check_branch
          %281 = sbr.rel (%p279) target = $region48
        $region47: #{tpu_custom_call.1} parent=35 // pred_region
          %282 = dma.done [#allocation6], 16
        $region48: #{tpu_custom_call.1} parent=35 // pred_fallthru
          _
        // Predicated region
        $region49: #{tpu_custom_call.1} parent=35 // pred_check
          %p283 = pneg %p145
        $region50: #{tpu_custom_call.1} parent=35 // pred_check_branch
          %285 = sbr.rel (%p283) target = $region52
        $region51: #{tpu_custom_call.1} parent=35 // pred_region
          %286 = dma.done [#allocation9], 16
        $region52: #{tpu_custom_call.1} parent=35 // pred_fallthru
          _
        %s287 = sand.u32 %s52, 1
        %s288 = scalar_lea.sflag [#allocation3], %s287
        %s289 = sand.u32 %s52, 1
        %s290 = smul.addr %s289, 512
        %s291 = scalar_lea.vmem [#allocation2], %s290
        %p292 = pneg %p65
        %p293 = pneg %p62
        %p294 = pneg %p93
        %p295 = pneg %p90
        %p296 = pneg %p119
        %p297 = pneg %p116
        %p298 = pneg %p145
        %p299 = pneg %p142
        %p300 = pneg %p173
        %p301 = pneg %p170
        %s302 = sand.u32 %s160, 1
        %s303 = scalar_lea.sflag [#allocation4], %s302
        %s304 = sand.u32 %s160, 1
        %s305 = smul.addr %s304, 256
        %s306 = scalar_lea.vmem [#allocation10], %s305
        %s307 = smul.u32 64, %s28
        %s308 = smul.u32 2, %s30
        %s309 = smul.u32 32, %s30
        %s310 = smul.u32 64, %s28
        %v312 = vld [vmem:[%s270] sm:$0xff]
        %v313 = vld [vmem:[%s270 + $0x8] sm:$0xff]
        %v314 = vld [vmem:[%s270 + $0x10] sm:$0xff]
        %v315 = vld [vmem:[%s270 + $0x18] sm:$0xff]
        %v316 = vld [vmem:[%s270 + $0x20] sm:$0xff]
        %v317 = vld [vmem:[%s270 + $0x28] sm:$0xff]
        %v318 = vld [vmem:[%s270 + $0x30] sm:$0xff]
        %v319 = vld [vmem:[%s270 + $0x38] sm:$0xff]
        %v320 = vld [vmem:[%s270 + $0x40] sm:$0xff]
        %v321 = vld [vmem:[%s270 + $0x48] sm:$0xff]
        %v322 = vld [vmem:[%s270 + $0x50] sm:$0xff]
        %v323 = vld [vmem:[%s270 + $0x58] sm:$0xff]
        %v324 = vld [vmem:[%s270 + $0x60] sm:$0xff]
        %v325 = vld [vmem:[%s270 + $0x68] sm:$0xff]
        %v326 = vld [vmem:[%s270 + $0x70] sm:$0xff]
        %v327 = vld [vmem:[%s270 + $0x78] sm:$0xff]
        %v328 = vld [vmem:[%s270 + $0x80] sm:$0xff]
        %v329 = vld [vmem:[%s270 + $0x88] sm:$0xff]
        %v330 = vld [vmem:[%s270 + $0x90] sm:$0xff]
        %v331 = vld [vmem:[%s270 + $0x98] sm:$0xff]
        %v332 = vld [vmem:[%s270 + $0xa0] sm:$0xff]
        %v333 = vld [vmem:[%s270 + $0xa8] sm:$0xff]
        %v334 = vld [vmem:[%s270 + $0xb0] sm:$0xff]
        %v335 = vld [vmem:[%s270 + $0xb8] sm:$0xff]
        %v336 = vld [vmem:[%s270 + $0xc0] sm:$0xff]
        %v337 = vld [vmem:[%s270 + $0xc8] sm:$0xff]
        %v338 = vld [vmem:[%s270 + $0xd0] sm:$0xff]
        %v339 = vld [vmem:[%s270 + $0xd8] sm:$0xff]
        %v340 = vld [vmem:[%s270 + $0xe0] sm:$0xff]
        %v341 = vld [vmem:[%s270 + $0xe8] sm:$0xff]
        %v342 = vld [vmem:[%s270 + $0xf0] sm:$0xff]
        %v343 = vld [vmem:[%s270 + $0xf8] sm:$0xff]
        %v344 = vld [vmem:[%s270 + $0x100] sm:$0xff]
        %v345 = vld [vmem:[%s270 + $0x108] sm:$0xff]
        %v346 = vld [vmem:[%s270 + $0x110] sm:$0xff]
        %v347 = vld [vmem:[%s270 + $0x118] sm:$0xff]
        %v348 = vld [vmem:[%s270 + $0x120] sm:$0xff]
        %v349 = vld [vmem:[%s270 + $0x128] sm:$0xff]
        %v350 = vld [vmem:[%s270 + $0x130] sm:$0xff]
        %v351 = vld [vmem:[%s270 + $0x138] sm:$0xff]
        %v352 = vld [vmem:[%s270 + $0x140] sm:$0xff]
        %v353 = vld [vmem:[%s270 + $0x148] sm:$0xff]
        %v354 = vld [vmem:[%s270 + $0x150] sm:$0xff]
        %v355 = vld [vmem:[%s270 + $0x158] sm:$0xff]
        %v356 = vld [vmem:[%s270 + $0x160] sm:$0xff]
        %v357 = vld [vmem:[%s270 + $0x168] sm:$0xff]
        %v358 = vld [vmem:[%s270 + $0x170] sm:$0xff]
        %v359 = vld [vmem:[%s270 + $0x178] sm:$0xff]
        %v360 = vld [vmem:[%s270 + $0x180] sm:$0xff]
        %v361 = vld [vmem:[%s270 + $0x188] sm:$0xff]
        %v362 = vld [vmem:[%s270 + $0x190] sm:$0xff]
        %v363 = vld [vmem:[%s270 + $0x198] sm:$0xff]
        %v364 = vld [vmem:[%s270 + $0x1a0] sm:$0xff]
        %v365 = vld [vmem:[%s270 + $0x1a8] sm:$0xff]
        %v366 = vld [vmem:[%s270 + $0x1b0] sm:$0xff]
        %v367 = vld [vmem:[%s270 + $0x1b8] sm:$0xff]
        %v368 = vld [vmem:[%s270 + $0x1c0] sm:$0xff]
        %v369 = vld [vmem:[%s270 + $0x1c8] sm:$0xff]
        %v370 = vld [vmem:[%s270 + $0x1d0] sm:$0xff]
        %v371 = vld [vmem:[%s270 + $0x1d8] sm:$0xff]
        %v372 = vld [vmem:[%s270 + $0x1e0] sm:$0xff]
        %v373 = vld [vmem:[%s270 + $0x1e8] sm:$0xff]
        %v374 = vld [vmem:[%s270 + $0x1f0] sm:$0xff]
        %v375 = vld [vmem:[%s270 + $0x1f8] sm:$0xff]
        %v376 = vld [vmem:[#allocation5] sm:$0xf]
        %v377 = vld [vmem:[#allocation5 + $0x4] sm:$0xf]
        %v378 = vld [vmem:[#allocation5 + $0x8] sm:$0xf]
        %v379 = vld [vmem:[#allocation5 + $0xc] sm:$0xf]
        %v380 = vld [vmem:[#allocation5 + $0x10] sm:$0xf]
        %v381 = vld [vmem:[#allocation5 + $0x14] sm:$0xf]
        %v382 = vld [vmem:[#allocation5 + $0x18] sm:$0xf]
        %v383 = vld [vmem:[#allocation5 + $0x1c] sm:$0xf]
        %v384 = vld [vmem:[#allocation5 + $0x20] sm:$0xf]
        %v385 = vld [vmem:[#allocation5 + $0x24] sm:$0xf]
        %v386 = vld [vmem:[#allocation5 + $0x28] sm:$0xf]
        %v387 = vld [vmem:[#allocation5 + $0x2c] sm:$0xf]
        %v388 = vld [vmem:[#allocation5 + $0x30] sm:$0xf]
        %v389 = vld [vmem:[#allocation5 + $0x34] sm:$0xf]
        %v390 = vld [vmem:[#allocation5 + $0x38] sm:$0xf]
        %v391 = vld [vmem:[#allocation5 + $0x3c] sm:$0xf]
        %v392 = vld [vmem:[#allocation5 + $0x40] sm:$0xf]
        %v393 = vld [vmem:[#allocation5 + $0x44] sm:$0xf]
        %v394 = vld [vmem:[#allocation5 + $0x48] sm:$0xf]
        %v395 = vld [vmem:[#allocation5 + $0x4c] sm:$0xf]
        %v396 = vld [vmem:[#allocation5 + $0x50] sm:$0xf]
        %v397 = vld [vmem:[#allocation5 + $0x54] sm:$0xf]
        %v398 = vld [vmem:[#allocation5 + $0x58] sm:$0xf]
        %v399 = vld [vmem:[#allocation5 + $0x5c] sm:$0xf]
        %v400 = vld [vmem:[#allocation5 + $0x60] sm:$0xf]
        %v401 = vld [vmem:[#allocation5 + $0x64] sm:$0xf]
        %v402 = vld [vmem:[#allocation5 + $0x68] sm:$0xf]
        %v403 = vld [vmem:[#allocation5 + $0x6c] sm:$0xf]
        %v404 = vld [vmem:[#allocation5 + $0x70] sm:$0xf]
        %v405 = vld [vmem:[#allocation5 + $0x74] sm:$0xf]
        %v406 = vld [vmem:[#allocation5 + $0x78] sm:$0xf]
        %v407 = vld [vmem:[#allocation5 + $0x7c] sm:$0xf]
        %v472 = vunpack.c.l.b16 %v312
        %v473 = vunpack.c.h.b16 %v312
        %v474 = vunpack.c.l.b16 %v313
        %v475 = vunpack.c.h.b16 %v313
        %v476 = vunpack.c.l.b16 %v314
        %v477 = vunpack.c.h.b16 %v314
        %v478 = vunpack.c.l.b16 %v315
        %v479 = vunpack.c.h.b16 %v315
        %v480 = vunpack.c.l.b16 %v316
        %v481 = vunpack.c.h.b16 %v316
        %v482 = vunpack.c.l.b16 %v317
        %v483 = vunpack.c.h.b16 %v317
        %v484 = vunpack.c.l.b16 %v318
        %v485 = vunpack.c.h.b16 %v318
        %v486 = vunpack.c.l.b16 %v319
        %v487 = vunpack.c.h.b16 %v319
        %v488 = vunpack.c.l.b16 %v320
        %v489 = vunpack.c.h.b16 %v320
        %v490 = vunpack.c.l.b16 %v321
        %v491 = vunpack.c.h.b16 %v321
        %v492 = vunpack.c.l.b16 %v322
        %v493 = vunpack.c.h.b16 %v322
        %v494 = vunpack.c.l.b16 %v323
        %v495 = vunpack.c.h.b16 %v323
        %v496 = vunpack.c.l.b16 %v324
        %v497 = vunpack.c.h.b16 %v324
        %v498 = vunpack.c.l.b16 %v325
        %v499 = vunpack.c.h.b16 %v325
        %v500 = vunpack.c.l.b16 %v326
        %v501 = vunpack.c.h.b16 %v326
        %v502 = vunpack.c.l.b16 %v327
        %v503 = vunpack.c.h.b16 %v327
        %v504 = vunpack.c.l.b16 %v328
        %v505 = vunpack.c.h.b16 %v328
        %v506 = vunpack.c.l.b16 %v329
        %v507 = vunpack.c.h.b16 %v329
        %v508 = vunpack.c.l.b16 %v330
        %v509 = vunpack.c.h.b16 %v330
        %v510 = vunpack.c.l.b16 %v331
        %v511 = vunpack.c.h.b16 %v331
        %v512 = vunpack.c.l.b16 %v332
        %v513 = vunpack.c.h.b16 %v332
        %v514 = vunpack.c.l.b16 %v333
        %v515 = vunpack.c.h.b16 %v333
        %v516 = vunpack.c.l.b16 %v334
        %v517 = vunpack.c.h.b16 %v334
        %v518 = vunpack.c.l.b16 %v335
        %v519 = vunpack.c.h.b16 %v335
        %v520 = vunpack.c.l.b16 %v336
        %v521 = vunpack.c.h.b16 %v336
        %v522 = vunpack.c.l.b16 %v337
        %v523 = vunpack.c.h.b16 %v337
        %v524 = vunpack.c.l.b16 %v338
        %v525 = vunpack.c.h.b16 %v338
        %v526 = vunpack.c.l.b16 %v339
        %v527 = vunpack.c.h.b16 %v339
        %v528 = vunpack.c.l.b16 %v340
        %v529 = vunpack.c.h.b16 %v340
        %v530 = vunpack.c.l.b16 %v341
        %v531 = vunpack.c.h.b16 %v341
        %v532 = vunpack.c.l.b16 %v342
        %v533 = vunpack.c.h.b16 %v342
        %v534 = vunpack.c.l.b16 %v343
        %v535 = vunpack.c.h.b16 %v343
        %v536 = vunpack.c.l.b16 %v344
        %v537 = vunpack.c.h.b16 %v344
        %v538 = vunpack.c.l.b16 %v345
        %v539 = vunpack.c.h.b16 %v345
        %v540 = vunpack.c.l.b16 %v346
        %v541 = vunpack.c.h.b16 %v346
        %v542 = vunpack.c.l.b16 %v347
        %v543 = vunpack.c.h.b16 %v347
        %v544 = vunpack.c.l.b16 %v348
        %v545 = vunpack.c.h.b16 %v348
        %v546 = vunpack.c.l.b16 %v349
        %v547 = vunpack.c.h.b16 %v349
        %v548 = vunpack.c.l.b16 %v350
        %v549 = vunpack.c.h.b16 %v350
        %v550 = vunpack.c.l.b16 %v351
        %v551 = vunpack.c.h.b16 %v351
        %v552 = vunpack.c.l.b16 %v352
        %v553 = vunpack.c.h.b16 %v352
        %v554 = vunpack.c.l.b16 %v353
        %v555 = vunpack.c.h.b16 %v353
        %v556 = vunpack.c.l.b16 %v354
        %v557 = vunpack.c.h.b16 %v354
        %v558 = vunpack.c.l.b16 %v355
        %v559 = vunpack.c.h.b16 %v355
        %v560 = vunpack.c.l.b16 %v356
        %v561 = vunpack.c.h.b16 %v356
        %v562 = vunpack.c.l.b16 %v357
        %v563 = vunpack.c.h.b16 %v357
        %v564 = vunpack.c.l.b16 %v358
        %v565 = vunpack.c.h.b16 %v358
        %v566 = vunpack.c.l.b16 %v359
        %v567 = vunpack.c.h.b16 %v359
        %v568 = vunpack.c.l.b16 %v360
        %v569 = vunpack.c.h.b16 %v360
        %v570 = vunpack.c.l.b16 %v361
        %v571 = vunpack.c.h.b16 %v361
        %v572 = vunpack.c.l.b16 %v362
        %v573 = vunpack.c.h.b16 %v362
        %v574 = vunpack.c.l.b16 %v363
        %v575 = vunpack.c.h.b16 %v363
        %v576 = vunpack.c.l.b16 %v364
        %v577 = vunpack.c.h.b16 %v364
        %v578 = vunpack.c.l.b16 %v365
        %v579 = vunpack.c.h.b16 %v365
        %v580 = vunpack.c.l.b16 %v366
        %v581 = vunpack.c.h.b16 %v366
        %v582 = vunpack.c.l.b16 %v367
        %v583 = vunpack.c.h.b16 %v367
        %v584 = vunpack.c.l.b16 %v368
        %v585 = vunpack.c.h.b16 %v368
        %v586 = vunpack.c.l.b16 %v369
        %v587 = vunpack.c.h.b16 %v369
        %v588 = vunpack.c.l.b16 %v370
        %v589 = vunpack.c.h.b16 %v370
        %v590 = vunpack.c.l.b16 %v371
        %v591 = vunpack.c.h.b16 %v371
        %v592 = vunpack.c.l.b16 %v372
        %v593 = vunpack.c.h.b16 %v372
        %v594 = vunpack.c.l.b16 %v373
        %v595 = vunpack.c.h.b16 %v373
        %v596 = vunpack.c.l.b16 %v374
        %v597 = vunpack.c.h.b16 %v374
        %v598 = vunpack.c.l.b16 %v375
        %v599 = vunpack.c.h.b16 %v375
        %v600 = vpack.c.b16 %v474, %v472
        %v601 = vpack.c.b16 %v475, %v473
        %v602 = vpack.c.b16 %v478, %v476
        %v603 = vpack.c.b16 %v479, %v477
        %v604 = vpack.c.b16 %v482, %v480
        %v605 = vpack.c.b16 %v483, %v481
        %v606 = vpack.c.b16 %v486, %v484
        %v607 = vpack.c.b16 %v487, %v485
        %v608 = vpack.c.b16 %v490, %v488
        %v609 = vpack.c.b16 %v491, %v489
        %v610 = vpack.c.b16 %v494, %v492
        %v611 = vpack.c.b16 %v495, %v493
        %v612 = vpack.c.b16 %v498, %v496
        %v613 = vpack.c.b16 %v499, %v497
        %v614 = vpack.c.b16 %v502, %v500
        %v615 = vpack.c.b16 %v503, %v501
        %v616 = vpack.c.b16 %v506, %v504
        %v617 = vpack.c.b16 %v507, %v505
        %v618 = vpack.c.b16 %v510, %v508
        %v619 = vpack.c.b16 %v511, %v509
        %v620 = vpack.c.b16 %v514, %v512
        %v621 = vpack.c.b16 %v515, %v513
        %v622 = vpack.c.b16 %v518, %v516
        %v623 = vpack.c.b16 %v519, %v517
        %v624 = vpack.c.b16 %v522, %v520
        %v625 = vpack.c.b16 %v523, %v521
        %v626 = vpack.c.b16 %v526, %v524
        %v627 = vpack.c.b16 %v527, %v525
        %v628 = vpack.c.b16 %v530, %v528
        %v629 = vpack.c.b16 %v531, %v529
        %v630 = vpack.c.b16 %v534, %v532
        %v631 = vpack.c.b16 %v535, %v533
        %v632 = vpack.c.b16 %v538, %v536
        %v633 = vpack.c.b16 %v539, %v537
        %v634 = vpack.c.b16 %v542, %v540
        %v635 = vpack.c.b16 %v543, %v541
        %v636 = vpack.c.b16 %v546, %v544
        %v637 = vpack.c.b16 %v547, %v545
        %v638 = vpack.c.b16 %v550, %v548
        %v639 = vpack.c.b16 %v551, %v549
        %v640 = vpack.c.b16 %v554, %v552
        %v641 = vpack.c.b16 %v555, %v553
        %v642 = vpack.c.b16 %v558, %v556
        %v643 = vpack.c.b16 %v559, %v557
        %v644 = vpack.c.b16 %v562, %v560
        %v645 = vpack.c.b16 %v563, %v561
        %v646 = vpack.c.b16 %v566, %v564
        %v647 = vpack.c.b16 %v567, %v565
        %v648 = vpack.c.b16 %v570, %v568
        %v649 = vpack.c.b16 %v571, %v569
        %v650 = vpack.c.b16 %v574, %v572
        %v651 = vpack.c.b16 %v575, %v573
        %v652 = vpack.c.b16 %v578, %v576
        %v653 = vpack.c.b16 %v579, %v577
        %v654 = vpack.c.b16 %v582, %v580
        %v655 = vpack.c.b16 %v583, %v581
        %v656 = vpack.c.b16 %v586, %v584
        %v657 = vpack.c.b16 %v587, %v585
        %v658 = vpack.c.b16 %v590, %v588
        %v659 = vpack.c.b16 %v591, %v589
        %v660 = vpack.c.b16 %v594, %v592
        %v661 = vpack.c.b16 %v595, %v593
        %v662 = vpack.c.b16 %v598, %v596
        %v663 = vpack.c.b16 %v599, %v597
        %v760 = vunpack.c.l.b16 %v376
        %v761 = vunpack.c.l.b16 %v377
        %v762 = vunpack.c.l.b16 %v378
        %v763 = vunpack.c.l.b16 %v379
        %v764 = vunpack.c.l.b16 %v380
        %v765 = vunpack.c.l.b16 %v381
        %v766 = vunpack.c.l.b16 %v382
        %v767 = vunpack.c.l.b16 %v383
        %v768 = vunpack.c.l.b16 %v384
        %v769 = vunpack.c.l.b16 %v385
        %v770 = vunpack.c.l.b16 %v386
        %v771 = vunpack.c.l.b16 %v387
        %v772 = vunpack.c.l.b16 %v388
        %v773 = vunpack.c.l.b16 %v389
        %v774 = vunpack.c.l.b16 %v390
        %v775 = vunpack.c.l.b16 %v391
        %v776 = vunpack.c.l.b16 %v392
        %v777 = vunpack.c.l.b16 %v393
        %v778 = vunpack.c.l.b16 %v394
        %v779 = vunpack.c.l.b16 %v395
        %v780 = vunpack.c.l.b16 %v396
        %v781 = vunpack.c.l.b16 %v397
        %v782 = vunpack.c.l.b16 %v398
        %v783 = vunpack.c.l.b16 %v399
        %v784 = vunpack.c.l.b16 %v400
        %v785 = vunpack.c.l.b16 %v401
        %v786 = vunpack.c.l.b16 %v402
        %v787 = vunpack.c.l.b16 %v403
        %v788 = vunpack.c.l.b16 %v404
        %v789 = vunpack.c.l.b16 %v405
        %v790 = vunpack.c.l.b16 %v406
        %v791 = vunpack.c.l.b16 %v407
        %v792 = vpack.c.b16 %v761, %v760
        %v793 = vpack.c.b16 %v763, %v762
        %v794 = vpack.c.b16 %v765, %v764
        %v795 = vpack.c.b16 %v767, %v766
        %v796 = vpack.c.b16 %v769, %v768
        %v797 = vpack.c.b16 %v771, %v770
        %v798 = vpack.c.b16 %v773, %v772
        %v799 = vpack.c.b16 %v775, %v774
        %v800 = vpack.c.b16 %v777, %v776
        %v801 = vpack.c.b16 %v779, %v778
        %v802 = vpack.c.b16 %v781, %v780
        %v803 = vpack.c.b16 %v783, %v782
        %v804 = vpack.c.b16 %v785, %v784
        %v805 = vpack.c.b16 %v787, %v786
        %v806 = vpack.c.b16 %v789, %v788
        %v807 = vpack.c.b16 %v791, %v790
        %824 = vmatprep.subr.bf16.mxu0 0
        %825 = vmatpush1.bf16.msra.mxu0 %v792
        %826 = vmatprep.subr.bf16.mxu0 0
        %827 = vmatpush1.bf16.msra.mxu0 %v793
        %828 = vmatprep.subr.bf16.mxu0 0
        %829 = vmatpush1.bf16.msra.mxu0 %v794
        %830 = vmatprep.subr.bf16.mxu0 0
        %831 = vmatpush1.bf16.msra.mxu0 %v795
        %832 = vmatprep.subr.bf16.mxu0 0
        %833 = vmatpush1.bf16.msra.mxu0 %v796
        %834 = vmatprep.subr.bf16.mxu0 0
        %835 = vmatpush1.bf16.msra.mxu0 %v797
        %836 = vmatprep.subr.bf16.mxu0 0
        %837 = vmatpush1.bf16.msra.mxu0 %v798
        %838 = vmatprep.subr.bf16.mxu0 0
        %839 = vmatpush1.bf16.msra.mxu0 %v799
        %840 = vmatprep.subr.bf16.mxu0 0
        %841 = vmatpush1.bf16.msra.mxu0 %v800
        %842 = vmatprep.subr.bf16.mxu0 0
        %843 = vmatpush1.bf16.msra.mxu0 %v801
        %844 = vmatprep.subr.bf16.mxu0 0
        %845 = vmatpush1.bf16.msra.mxu0 %v802
        %846 = vmatprep.subr.bf16.mxu0 0
        %847 = vmatpush1.bf16.msra.mxu0 %v803
        %848 = vmatprep.subr.bf16.mxu0 0
        %849 = vmatpush1.bf16.msra.mxu0 %v804
        %850 = vmatprep.subr.bf16.mxu0 0
        %851 = vmatpush1.bf16.msra.mxu0 %v805
        %852 = vmatprep.subr.bf16.mxu0 0
        %853 = vmatpush1.bf16.msra.mxu0 %v806
        %854 = vmatprep.subr.bf16.mxu0 0
        %855 = vmatpush1.bf16.msra.mxu0 %v807
        %856 = vmatprep.mubr.bf16.mxu0 %v601
        %857 = vmatmul.mubr.bf16.gmra.mrb[0].mxu0 %v600
        %v858 = vpop.f32.mrb[0].mxu0
        %v859 = vadd.f32 0.0, %v858
        %v860 = vpop.f32.mrb[0].mxu0
        %v861 = vpop.f32.mrb[0].mxu0
        %v862 = vadd.f32 0.0, %v861
        %v863 = vpop.f32.mrb[0].mxu0
        %864 = vmatprep.mubr.bf16.mxu0 %v603
        %865 = vmatmul.mubr.bf16.gmra.mrb[0].mxu0 %v602
        %v866 = vpop.f32.mrb[0].mxu0
        %v867 = vadd.f32 0.0, %v866
        %v868 = vpop.f32.mrb[0].mxu0
        %v869 = vpop.f32.mrb[0].mxu0
        %v870 = vadd.f32 0.0, %v869
        %v871 = vpop.f32.mrb[0].mxu0
        %872 = vmatprep.mubr.bf16.mxu0 %v605
        %873 = vmatmul.mubr.bf16.gmra.mrb[0].mxu0 %v604
        %v874 = vpop.f32.mrb[0].mxu0
        %v875 = vadd.f32 0.0, %v874
        %v876 = vpop.f32.mrb[0].mxu0
        %v877 = vpop.f32.mrb[0].mxu0
        %v878 = vadd.f32 0.0, %v877
        %v879 = vpop.f32.mrb[0].mxu0
        %880 = vmatprep.mubr.bf16.mxu0 %v607
        %881 = vmatmul.mubr.bf16.gmra.mrb[0].mxu0 %v606
        %v882 = vpop.f32.mrb[0].mxu0
        %v883 = vadd.f32 0.0, %v882
        %v884 = vpop.f32.mrb[0].mxu0
        %v885 = vpop.f32.mrb[0].mxu0
        %v886 = vadd.f32 0.0, %v885
        %v887 = vpop.f32.mrb[0].mxu0
        %888 = vmatprep.mubr.bf16.mxu0 %v609
        %889 = vmatmul.mubr.bf16.gmra.mrb[0].mxu0 %v608
        %v890 = vpop.f32.mrb[0].mxu0
        %v891 = vadd.f32 0.0, %v890
        %v892 = vpop.f32.mrb[0].mxu0
        %v893 = vpop.f32.mrb[0].mxu0
        %v894 = vadd.f32 0.0, %v893
        %v895 = vpop.f32.mrb[0].mxu0
        %896 = vmatprep.mubr.bf16.mxu0 %v611
        %897 = vmatmul.mubr.bf16.gmra.mrb[0].mxu0 %v610
        %v898 = vpop.f32.mrb[0].mxu0
        %v899 = vadd.f32 0.0, %v898
        %v900 = vpop.f32.mrb[0].mxu0
        %v901 = vpop.f32.mrb[0].mxu0
        %v902 = vadd.f32 0.0, %v901
        %v903 = vpop.f32.mrb[0].mxu0
        %904 = vmatprep.mubr.bf16.mxu0 %v613
        %905 = vmatmul.mubr.bf16.gmra.mrb[0].mxu0 %v612
        %v906 = vpop.f32.mrb[0].mxu0
        %v907 = vadd.f32 0.0, %v906
        %v908 = vpop.f32.mrb[0].mxu0
        %v909 = vpop.f32.mrb[0].mxu0
        %v910 = vadd.f32 0.0, %v909
        %v911 = vpop.f32.mrb[0].mxu0
        %912 = vmatprep.mubr.bf16.mxu0 %v615
        %913 = vmatmul.mubr.bf16.gmra.mrb[0].mxu0 %v614
        %v914 = vpop.f32.mrb[0].mxu0
        %v915 = vadd.f32 0.0, %v914
        %v916 = vpop.f32.mrb[0].mxu0
        %v917 = vpop.f32.mrb[0].mxu0
        %v918 = vadd.f32 0.0, %v917
        %v919 = vpop.f32.mrb[0].mxu0
        %920 = vmatprep.mubr.bf16.mxu0 %v617
        %921 = vmatmul.mubr.bf16.gmra.mrb[0].mxu0 %v616
        %v922 = vpop.f32.mrb[0].mxu0
        %v923 = vadd.f32 0.0, %v922
        %v924 = vpop.f32.mrb[0].mxu0
        %v925 = vpop.f32.mrb[0].mxu0
        %v926 = vadd.f32 0.0, %v925
        %v927 = vpop.f32.mrb[0].mxu0
        %928 = vmatprep.mubr.bf16.mxu0 %v619
        %929 = vmatmul.mubr.bf16.gmra.mrb[0].mxu0 %v618
        %v930 = vpop.f32.mrb[0].mxu0
        %v931 = vadd.f32 0.0, %v930
        %v932 = vpop.f32.mrb[0].mxu0
        %v933 = vpop.f32.mrb[0].mxu0
        %v934 = vadd.f32 0.0, %v933
        %v935 = vpop.f32.mrb[0].mxu0
        %936 = vmatprep.mubr.bf16.mxu0 %v621
        %937 = vmatmul.mubr.bf16.gmra.mrb[0].mxu0 %v620
        %v938 = vpop.f32.mrb[0].mxu0
        %v939 = vadd.f32 0.0, %v938
        %v940 = vpop.f32.mrb[0].mxu0
        %v941 = vpop.f32.mrb[0].mxu0
        %v942 = vadd.f32 0.0, %v941
        %v943 = vpop.f32.mrb[0].mxu0
        %944 = vmatprep.mubr.bf16.mxu0 %v623
        %945 = vmatmul.mubr.bf16.gmra.mrb[0].mxu0 %v622
        %v946 = vpop.f32.mrb[0].mxu0
        %v947 = vadd.f32 0.0, %v946
        %v948 = vpop.f32.mrb[0].mxu0
        %v949 = vpop.f32.mrb[0].mxu0
        %v950 = vadd.f32 0.0, %v949
        %v951 = vpop.f32.mrb[0].mxu0
        %952 = vmatprep.mubr.bf16.mxu0 %v625
        %953 = vmatmul.mubr.bf16.gmra.mrb[0].mxu0 %v624
        %v954 = vpop.f32.mrb[0].mxu0
        %v955 = vadd.f32 0.0, %v954
        %v956 = vpop.f32.mrb[0].mxu0
        %v957 = vpop.f32.mrb[0].mxu0
        %v958 = vadd.f32 0.0, %v957
        %v959 = vpop.f32.mrb[0].mxu0
        %960 = vmatprep.mubr.bf16.mxu0 %v627
        %961 = vmatmul.mubr.bf16.gmra.mrb[0].mxu0 %v626
        %v962 = vpop.f32.mrb[0].mxu0
        %v963 = vadd.f32 0.0, %v962
        %v964 = vpop.f32.mrb[0].mxu0
        %v965 = vpop.f32.mrb[0].mxu0
        %v966 = vadd.f32 0.0, %v965
        %v967 = vpop.f32.mrb[0].mxu0
        %968 = vmatprep.mubr.bf16.mxu0 %v629
        %969 = vmatmul.mubr.bf16.gmra.mrb[0].mxu0 %v628
        %v970 = vpop.f32.mrb[0].mxu0
        %v971 = vadd.f32 0.0, %v970
        %v972 = vpop.f32.mrb[0].mxu0
        %v973 = vpop.f32.mrb[0].mxu0
        %v974 = vadd.f32 0.0, %v973
        %v975 = vpop.f32.mrb[0].mxu0
        %976 = vmatprep.mubr.bf16.mxu0 %v631
        %977 = vmatmul.mubr.bf16.gmra.mrb[0].mxu0 %v630
        %v978 = vpop.f32.mrb[0].mxu0
        %v979 = vadd.f32 0.0, %v978
        %v980 = vpop.f32.mrb[0].mxu0
        %v981 = vpop.f32.mrb[0].mxu0
        %v982 = vadd.f32 0.0, %v981
        %v983 = vpop.f32.mrb[0].mxu0
        %984 = vmatprep.mubr.bf16.mxu0 %v633
        %985 = vmatmul.mubr.bf16.gmra.mrb[0].mxu0 %v632
        %v986 = vpop.f32.mrb[0].mxu0
        %v987 = vadd.f32 0.0, %v986
        %v988 = vpop.f32.mrb[0].mxu0
        %v989 = vpop.f32.mrb[0].mxu0
        %v990 = vadd.f32 0.0, %v989
        %v991 = vpop.f32.mrb[0].mxu0
        %992 = vmatprep.mubr.bf16.mxu0 %v635
        %993 = vmatmul.mubr.bf16.gmra.mrb[0].mxu0 %v634
        %v994 = vpop.f32.mrb[0].mxu0
        %v995 = vadd.f32 0.0, %v994
        %v996 = vpop.f32.mrb[0].mxu0
        %v997 = vpop.f32.mrb[0].mxu0
        %v998 = vadd.f32 0.0, %v997
        %v999 = vpop.f32.mrb[0].mxu0
        %1000 = vmatprep.mubr.bf16.mxu0 %v637
        %1001 = vmatmul.mubr.bf16.gmra.mrb[0].mxu0 %v636
        %v1002 = vpop.f32.mrb[0].mxu0
        %v1003 = vadd.f32 0.0, %v1002
        %v1004 = vpop.f32.mrb[0].mxu0
        %v1005 = vpop.f32.mrb[0].mxu0
        %v1006 = vadd.f32 0.0, %v1005
        %v1007 = vpop.f32.mrb[0].mxu0
        %1008 = vmatprep.mubr.bf16.mxu0 %v639
        %1009 = vmatmul.mubr.bf16.gmra.mrb[0].mxu0 %v638
        %v1010 = vpop.f32.mrb[0].mxu0
        %v1011 = vadd.f32 0.0, %v1010
        %v1012 = vpop.f32.mrb[0].mxu0
        %v1013 = vpop.f32.mrb[0].mxu0
        %v1014 = vadd.f32 0.0, %v1013
        %v1015 = vpop.f32.mrb[0].mxu0
        %1016 = vmatprep.mubr.bf16.mxu0 %v641
        %1017 = vmatmul.mubr.bf16.gmra.mrb[0].mxu0 %v640
        %v1018 = vpop.f32.mrb[0].mxu0
        %v1019 = vadd.f32 0.0, %v1018
        %v1020 = vpop.f32.mrb[0].mxu0
        %v1021 = vpop.f32.mrb[0].mxu0
        %v1022 = vadd.f32 0.0, %v1021
        %v1023 = vpop.f32.mrb[0].mxu0
        %1024 = vmatprep.mubr.bf16.mxu0 %v643
        %1025 = vmatmul.mubr.bf16.gmra.mrb[0].mxu0 %v642
        %v1026 = vpop.f32.mrb[0].mxu0
        %v1027 = vadd.f32 0.0, %v1026
        %v1028 = vpop.f32.mrb[0].mxu0
        %v1029 = vpop.f32.mrb[0].mxu0
        %v1030 = vadd.f32 0.0, %v1029
        %v1031 = vpop.f32.mrb[0].mxu0
        %1032 = vmatprep.mubr.bf16.mxu0 %v645
        %1033 = vmatmul.mubr.bf16.gmra.mrb[0].mxu0 %v644
        %v1034 = vpop.f32.mrb[0].mxu0
        %v1035 = vadd.f32 0.0, %v1034
        %v1036 = vpop.f32.mrb[0].mxu0
        %v1037 = vpop.f32.mrb[0].mxu0
        %v1038 = vadd.f32 0.0, %v1037
        %v1039 = vpop.f32.mrb[0].mxu0
        %1040 = vmatprep.mubr.bf16.mxu0 %v647
        %1041 = vmatmul.mubr.bf16.gmra.mrb[0].mxu0 %v646
        %v1042 = vpop.f32.mrb[0].mxu0
        %v1043 = vadd.f32 0.0, %v1042
        %v1044 = vpop.f32.mrb[0].mxu0
        %v1045 = vpop.f32.mrb[0].mxu0
        %v1046 = vadd.f32 0.0, %v1045
        %v1047 = vpop.f32.mrb[0].mxu0
        %1048 = vmatprep.mubr.bf16.mxu0 %v649
        %1049 = vmatmul.mubr.bf16.gmra.mrb[0].mxu0 %v648
        %v1050 = vpop.f32.mrb[0].mxu0
        %v1051 = vadd.f32 0.0, %v1050
        %v1052 = vpop.f32.mrb[0].mxu0
        %v1053 = vpop.f32.mrb[0].mxu0
        %v1054 = vadd.f32 0.0, %v1053
        %v1055 = vpop.f32.mrb[0].mxu0
        %1056 = vmatprep.mubr.bf16.mxu0 %v651
        %1057 = vmatmul.mubr.bf16.gmra.mrb[0].mxu0 %v650
        %v1058 = vpop.f32.mrb[0].mxu0
        %v1059 = vadd.f32 0.0, %v1058
        %v1060 = vpop.f32.mrb[0].mxu0
        %v1061 = vpop.f32.mrb[0].mxu0
        %v1062 = vadd.f32 0.0, %v1061
        %v1063 = vpop.f32.mrb[0].mxu0
        %1064 = vmatprep.mubr.bf16.mxu0 %v653
        %1065 = vmatmul.mubr.bf16.gmra.mrb[0].mxu0 %v652
        %v1066 = vpop.f32.mrb[0].mxu0
        %v1067 = vadd.f32 0.0, %v1066
        %v1068 = vpop.f32.mrb[0].mxu0
        %v1069 = vpop.f32.mrb[0].mxu0
        %v1070 = vadd.f32 0.0, %v1069
        %v1071 = vpop.f32.mrb[0].mxu0
        %1072 = vmatprep.mubr.bf16.mxu0 %v655
        %1073 = vmatmul.mubr.bf16.gmra.mrb[0].mxu0 %v654
        %v1074 = vpop.f32.mrb[0].mxu0
        %v1075 = vadd.f32 0.0, %v1074
        %v1076 = vpop.f32.mrb[0].mxu0
        %v1077 = vpop.f32.mrb[0].mxu0
        %v1078 = vadd.f32 0.0, %v1077
        %v1079 = vpop.f32.mrb[0].mxu0
        %1080 = vmatprep.mubr.bf16.mxu0 %v657
        %1081 = vmatmul.mubr.bf16.gmra.mrb[0].mxu0 %v656
        %v1082 = vpop.f32.mrb[0].mxu0
        %v1083 = vadd.f32 0.0, %v1082
        %v1084 = vpop.f32.mrb[0].mxu0
        %v1085 = vpop.f32.mrb[0].mxu0
        %v1086 = vadd.f32 0.0, %v1085
        %v1087 = vpop.f32.mrb[0].mxu0
        %1088 = vmatprep.mubr.bf16.mxu0 %v659
        %1089 = vmatmul.mubr.bf16.gmra.mrb[0].mxu0 %v658
        %v1090 = vpop.f32.mrb[0].mxu0
        %v1091 = vadd.f32 0.0, %v1090
        %v1092 = vpop.f32.mrb[0].mxu0
        %v1093 = vpop.f32.mrb[0].mxu0
        %v1094 = vadd.f32 0.0, %v1093
        %v1095 = vpop.f32.mrb[0].mxu0
        %1096 = vmatprep.mubr.bf16.mxu0 %v661
        %1097 = vmatmul.mubr.bf16.gmra.mrb[0].mxu0 %v660
        %v1098 = vpop.f32.mrb[0].mxu0
        %v1099 = vadd.f32 0.0, %v1098
        %v1100 = vpop.f32.mrb[0].mxu0
        %v1101 = vpop.f32.mrb[0].mxu0
        %v1102 = vadd.f32 0.0, %v1101
        %v1103 = vpop.f32.mrb[0].mxu0
        %1104 = vmatprep.mubr.bf16.mxu0 %v663
        %1105 = vmatmul.mubr.bf16.gmra.mrb[0].mxu0 %v662
        %v1106 = vpop.f32.mrb[0].mxu0
        %v1107 = vadd.f32 0.0, %v1106
        %v1108 = vpop.f32.mrb[0].mxu0
        %v1109 = vpop.f32.mrb[0].mxu0
        %v1110 = vadd.f32 0.0, %v1109
        %v1111 = vpop.f32.mrb[0].mxu0
        %1112 = vdwg.mxu0
        %v1113 = vld [vmem:[#allocation7] sm:$0x1]
        %v1114 = vld [vmem:[#allocation8] sm:$0x1]
        %v1116 = vlaneseq
        %v1117 = vshrl.u32 %v1116, 7
        %v1118 = vsub.s32 0, %v1117
        %v1119 = vrot.slane %v1113, %v1118
        %v1121 = vmul.f32 %v859, %v1119
        %v1122 = vmul.f32 %v862, %v1119
        %v1123 = vmul.f32 %v867, %v1119
        %v1124 = vmul.f32 %v870, %v1119
        %v1125 = vmul.f32 %v875, %v1119
        %v1126 = vmul.f32 %v878, %v1119
        %v1127 = vmul.f32 %v883, %v1119
        %v1128 = vmul.f32 %v886, %v1119
        %v1129 = vmul.f32 %v891, %v1119
        %v1130 = vmul.f32 %v894, %v1119
        %v1131 = vmul.f32 %v899, %v1119
        %v1132 = vmul.f32 %v902, %v1119
        %v1133 = vmul.f32 %v907, %v1119
        %v1134 = vmul.f32 %v910, %v1119
        %v1135 = vmul.f32 %v915, %v1119
        %v1136 = vmul.f32 %v918, %v1119
        %v1137 = vmul.f32 %v923, %v1119
        %v1138 = vmul.f32 %v926, %v1119
        %v1139 = vmul.f32 %v931, %v1119
        %v1140 = vmul.f32 %v934, %v1119
        %v1141 = vmul.f32 %v939, %v1119
        %v1142 = vmul.f32 %v942, %v1119
        %v1143 = vmul.f32 %v947, %v1119
        %v1144 = vmul.f32 %v950, %v1119
        %v1145 = vmul.f32 %v955, %v1119
        %v1146 = vmul.f32 %v958, %v1119
        %v1147 = vmul.f32 %v963, %v1119
        %v1148 = vmul.f32 %v966, %v1119
        %v1149 = vmul.f32 %v971, %v1119
        %v1150 = vmul.f32 %v974, %v1119
        %v1151 = vmul.f32 %v979, %v1119
        %v1152 = vmul.f32 %v982, %v1119
        %v1153 = vmul.f32 %v987, %v1119
        %v1154 = vmul.f32 %v990, %v1119
        %v1155 = vmul.f32 %v995, %v1119
        %v1156 = vmul.f32 %v998, %v1119
        %v1157 = vmul.f32 %v1003, %v1119
        %v1158 = vmul.f32 %v1006, %v1119
        %v1159 = vmul.f32 %v1011, %v1119
        %v1160 = vmul.f32 %v1014, %v1119
        %v1161 = vmul.f32 %v1019, %v1119
        %v1162 = vmul.f32 %v1022, %v1119
        %v1163 = vmul.f32 %v1027, %v1119
        %v1164 = vmul.f32 %v1030, %v1119
        %v1165 = vmul.f32 %v1035, %v1119
        %v1166 = vmul.f32 %v1038, %v1119
        %v1167 = vmul.f32 %v1043, %v1119
        %v1168 = vmul.f32 %v1046, %v1119
        %v1169 = vmul.f32 %v1051, %v1119
        %v1170 = vmul.f32 %v1054, %v1119
        %v1171 = vmul.f32 %v1059, %v1119
        %v1172 = vmul.f32 %v1062, %v1119
        %v1173 = vmul.f32 %v1067, %v1119
        %v1174 = vmul.f32 %v1070, %v1119
        %v1175 = vmul.f32 %v1075, %v1119
        %v1176 = vmul.f32 %v1078, %v1119
        %v1177 = vmul.f32 %v1083, %v1119
        %v1178 = vmul.f32 %v1086, %v1119
        %v1179 = vmul.f32 %v1091, %v1119
        %v1180 = vmul.f32 %v1094, %v1119
        %v1181 = vmul.f32 %v1099, %v1119
        %v1182 = vmul.f32 %v1102, %v1119
        %v1183 = vmul.f32 %v1107, %v1119
        %v1184 = vmul.f32 %v1110, %v1119
        %v1186 = vlaneseq
        %v1187 = vshrl.u32 %v1186, 7
        %v1188 = vsub.s32 0, %v1187
        %v1189 = vrot.slane %v1114, %v1188
        %v1191 = vadd.f32 %v1121, %v1189
        %v1192 = vadd.f32 %v1122, %v1189
        %v1193 = vadd.f32 %v1123, %v1189
        %v1194 = vadd.f32 %v1124, %v1189
        %v1195 = vadd.f32 %v1125, %v1189
        %v1196 = vadd.f32 %v1126, %v1189
        %v1197 = vadd.f32 %v1127, %v1189
        %v1198 = vadd.f32 %v1128, %v1189
        %v1199 = vadd.f32 %v1129, %v1189
        %v1200 = vadd.f32 %v1130, %v1189
        %v1201 = vadd.f32 %v1131, %v1189
        %v1202 = vadd.f32 %v1132, %v1189
        %v1203 = vadd.f32 %v1133, %v1189
        %v1204 = vadd.f32 %v1134, %v1189
        %v1205 = vadd.f32 %v1135, %v1189
        %v1206 = vadd.f32 %v1136, %v1189
        %v1207 = vadd.f32 %v1137, %v1189
        %v1208 = vadd.f32 %v1138, %v1189
        %v1209 = vadd.f32 %v1139, %v1189
        %v1210 = vadd.f32 %v1140, %v1189
        %v1211 = vadd.f32 %v1141, %v1189
        %v1212 = vadd.f32 %v1142, %v1189
        %v1213 = vadd.f32 %v1143, %v1189
        %v1214 = vadd.f32 %v1144, %v1189
        %v1215 = vadd.f32 %v1145, %v1189
        %v1216 = vadd.f32 %v1146, %v1189
        %v1217 = vadd.f32 %v1147, %v1189
        %v1218 = vadd.f32 %v1148, %v1189
        %v1219 = vadd.f32 %v1149, %v1189
        %v1220 = vadd.f32 %v1150, %v1189
        %v1221 = vadd.f32 %v1151, %v1189
        %v1222 = vadd.f32 %v1152, %v1189
        %v1223 = vadd.f32 %v1153, %v1189
        %v1224 = vadd.f32 %v1154, %v1189
        %v1225 = vadd.f32 %v1155, %v1189
        %v1226 = vadd.f32 %v1156, %v1189
        %v1227 = vadd.f32 %v1157, %v1189
        %v1228 = vadd.f32 %v1158, %v1189
        %v1229 = vadd.f32 %v1159, %v1189
        %v1230 = vadd.f32 %v1160, %v1189
        %v1231 = vadd.f32 %v1161, %v1189
        %v1232 = vadd.f32 %v1162, %v1189
        %v1233 = vadd.f32 %v1163, %v1189
        %v1234 = vadd.f32 %v1164, %v1189
        %v1235 = vadd.f32 %v1165, %v1189
        %v1236 = vadd.f32 %v1166, %v1189
        %v1237 = vadd.f32 %v1167, %v1189
        %v1238 = vadd.f32 %v1168, %v1189
        %v1239 = vadd.f32 %v1169, %v1189
        %v1240 = vadd.f32 %v1170, %v1189
        %v1241 = vadd.f32 %v1171, %v1189
        %v1242 = vadd.f32 %v1172, %v1189
        %v1243 = vadd.f32 %v1173, %v1189
        %v1244 = vadd.f32 %v1174, %v1189
        %v1245 = vadd.f32 %v1175, %v1189
        %v1246 = vadd.f32 %v1176, %v1189
        %v1247 = vadd.f32 %v1177, %v1189
        %v1248 = vadd.f32 %v1178, %v1189
        %v1249 = vadd.f32 %v1179, %v1189
        %v1250 = vadd.f32 %v1180, %v1189
        %v1251 = vadd.f32 %v1181, %v1189
        %v1252 = vadd.f32 %v1182, %v1189
        %v1253 = vadd.f32 %v1183, %v1189
        %v1254 = vadd.f32 %v1184, %v1189
        %v1255 = vmax.f32 %v1191, 0.0
        %v1256 = vmax.f32 %v1192, 0.0
        %v1257 = vmax.f32 %v1193, 0.0
        %v1258 = vmax.f32 %v1194, 0.0
        %v1259 = vmax.f32 %v1195, 0.0
        %v1260 = vmax.f32 %v1196, 0.0
        %v1261 = vmax.f32 %v1197, 0.0
        %v1262 = vmax.f32 %v1198, 0.0
        %v1263 = vmax.f32 %v1199, 0.0
        %v1264 = vmax.f32 %v1200, 0.0
        %v1265 = vmax.f32 %v1201, 0.0
        %v1266 = vmax.f32 %v1202, 0.0
        %v1267 = vmax.f32 %v1203, 0.0
        %v1268 = vmax.f32 %v1204, 0.0
        %v1269 = vmax.f32 %v1205, 0.0
        %v1270 = vmax.f32 %v1206, 0.0
        %v1271 = vmax.f32 %v1207, 0.0
        %v1272 = vmax.f32 %v1208, 0.0
        %v1273 = vmax.f32 %v1209, 0.0
        %v1274 = vmax.f32 %v1210, 0.0
        %v1275 = vmax.f32 %v1211, 0.0
        %v1276 = vmax.f32 %v1212, 0.0
        %v1277 = vmax.f32 %v1213, 0.0
        %v1278 = vmax.f32 %v1214, 0.0
        %v1279 = vmax.f32 %v1215, 0.0
        %v1280 = vmax.f32 %v1216, 0.0
        %v1281 = vmax.f32 %v1217, 0.0
        %v1282 = vmax.f32 %v1218, 0.0
        %v1283 = vmax.f32 %v1219, 0.0
        %v1284 = vmax.f32 %v1220, 0.0
        %v1285 = vmax.f32 %v1221, 0.0
        %v1286 = vmax.f32 %v1222, 0.0
        %v1287 = vmax.f32 %v1223, 0.0
        %v1288 = vmax.f32 %v1224, 0.0
        %v1289 = vmax.f32 %v1225, 0.0
        %v1290 = vmax.f32 %v1226, 0.0
        %v1291 = vmax.f32 %v1227, 0.0
        %v1292 = vmax.f32 %v1228, 0.0
        %v1293 = vmax.f32 %v1229, 0.0
        %v1294 = vmax.f32 %v1230, 0.0
        %v1295 = vmax.f32 %v1231, 0.0
        %v1296 = vmax.f32 %v1232, 0.0
        %v1297 = vmax.f32 %v1233, 0.0
        %v1298 = vmax.f32 %v1234, 0.0
        %v1299 = vmax.f32 %v1235, 0.0
        %v1300 = vmax.f32 %v1236, 0.0
        %v1301 = vmax.f32 %v1237, 0.0
        %v1302 = vmax.f32 %v1238, 0.0
        %v1303 = vmax.f32 %v1239, 0.0
        %v1304 = vmax.f32 %v1240, 0.0
        %v1305 = vmax.f32 %v1241, 0.0
        %v1306 = vmax.f32 %v1242, 0.0
        %v1307 = vmax.f32 %v1243, 0.0
        %v1308 = vmax.f32 %v1244, 0.0
        %v1309 = vmax.f32 %v1245, 0.0
        %v1310 = vmax.f32 %v1246, 0.0
        %v1311 = vmax.f32 %v1247, 0.0
        %v1312 = vmax.f32 %v1248, 0.0
        %v1313 = vmax.f32 %v1249, 0.0
        %v1314 = vmax.f32 %v1250, 0.0
        %v1315 = vmax.f32 %v1251, 0.0
        %v1316 = vmax.f32 %v1252, 0.0
        %v1317 = vmax.f32 %v1253, 0.0
        %v1318 = vmax.f32 %v1254, 0.0
        %v1319 = vpack.c.bf16 %v1256, %v1255
        %v1320 = vpack.c.bf16 %v1258, %v1257
        %v1321 = vpack.c.bf16 %v1260, %v1259
        %v1322 = vpack.c.bf16 %v1262, %v1261
        %v1323 = vpack.c.bf16 %v1264, %v1263
        %v1324 = vpack.c.bf16 %v1266, %v1265
        %v1325 = vpack.c.bf16 %v1268, %v1267
        %v1326 = vpack.c.bf16 %v1270, %v1269
        %v1327 = vpack.c.bf16 %v1272, %v1271
        %v1328 = vpack.c.bf16 %v1274, %v1273
        %v1329 = vpack.c.bf16 %v1276, %v1275
        %v1330 = vpack.c.bf16 %v1278, %v1277
        %v1331 = vpack.c.bf16 %v1280, %v1279
        %v1332 = vpack.c.bf16 %v1282, %v1281
        %v1333 = vpack.c.bf16 %v1284, %v1283
        %v1334 = vpack.c.bf16 %v1286, %v1285
        %v1335 = vpack.c.bf16 %v1288, %v1287
        %v1336 = vpack.c.bf16 %v1290, %v1289
        %v1337 = vpack.c.bf16 %v1292, %v1291
        %v1338 = vpack.c.bf16 %v1294, %v1293
        %v1339 = vpack.c.bf16 %v1296, %v1295
        %v1340 = vpack.c.bf16 %v1298, %v1297
        %v1341 = vpack.c.bf16 %v1300, %v1299
        %v1342 = vpack.c.bf16 %v1302, %v1301
        %v1343 = vpack.c.bf16 %v1304, %v1303
        %v1344 = vpack.c.bf16 %v1306, %v1305
        %v1345 = vpack.c.bf16 %v1308, %v1307
        %v1346 = vpack.c.bf16 %v1310, %v1309
        %v1347 = vpack.c.bf16 %v1312, %v1311
        %v1348 = vpack.c.bf16 %v1314, %v1313
        %v1349 = vpack.c.bf16 %v1316, %v1315
        %v1350 = vpack.c.bf16 %v1318, %v1317
        %v1383 = vunpack.c.l.b16 %v1319
        %v1384 = vunpack.c.h.b16 %v1319
        %v1385 = vunpack.c.l.b16 %v1320
        %v1386 = vunpack.c.h.b16 %v1320
        %v1387 = vunpack.c.l.b16 %v1321
        %v1388 = vunpack.c.h.b16 %v1321
        %v1389 = vunpack.c.l.b16 %v1322
        %v1390 = vunpack.c.h.b16 %v1322
        %v1391 = vunpack.c.l.b16 %v1323
        %v1392 = vunpack.c.h.b16 %v1323
        %v1393 = vunpack.c.l.b16 %v1324
        %v1394 = vunpack.c.h.b16 %v1324
        %v1395 = vunpack.c.l.b16 %v1325
        %v1396 = vunpack.c.h.b16 %v1325
        %v1397 = vunpack.c.l.b16 %v1326
        %v1398 = vunpack.c.h.b16 %v1326
        %v1399 = vunpack.c.l.b16 %v1327
        %v1400 = vunpack.c.h.b16 %v1327
        %v1401 = vunpack.c.l.b16 %v1328
        %v1402 = vunpack.c.h.b16 %v1328
        %v1403 = vunpack.c.l.b16 %v1329
        %v1404 = vunpack.c.h.b16 %v1329
        %v1405 = vunpack.c.l.b16 %v1330
        %v1406 = vunpack.c.h.b16 %v1330
        %v1407 = vunpack.c.l.b16 %v1331
        %v1408 = vunpack.c.h.b16 %v1331
        %v1409 = vunpack.c.l.b16 %v1332
        %v1410 = vunpack.c.h.b16 %v1332
        %v1411 = vunpack.c.l.b16 %v1333
        %v1412 = vunpack.c.h.b16 %v1333
        %v1413 = vunpack.c.l.b16 %v1334
        %v1414 = vunpack.c.h.b16 %v1334
        %v1415 = vunpack.c.l.b16 %v1335
        %v1416 = vunpack.c.h.b16 %v1335
        %v1417 = vunpack.c.l.b16 %v1336
        %v1418 = vunpack.c.h.b16 %v1336
        %v1419 = vunpack.c.l.b16 %v1337
        %v1420 = vunpack.c.h.b16 %v1337
        %v1421 = vunpack.c.l.b16 %v1338
        %v1422 = vunpack.c.h.b16 %v1338
        %v1423 = vunpack.c.l.b16 %v1339
        %v1424 = vunpack.c.h.b16 %v1339
        %v1425 = vunpack.c.l.b16 %v1340
        %v1426 = vunpack.c.h.b16 %v1340
        %v1427 = vunpack.c.l.b16 %v1341
        %v1428 = vunpack.c.h.b16 %v1341
        %v1429 = vunpack.c.l.b16 %v1342
        %v1430 = vunpack.c.h.b16 %v1342
        %v1431 = vunpack.c.l.b16 %v1343
        %v1432 = vunpack.c.h.b16 %v1343
        %v1433 = vunpack.c.l.b16 %v1344
        %v1434 = vunpack.c.h.b16 %v1344
        %v1435 = vunpack.c.l.b16 %v1345
        %v1436 = vunpack.c.h.b16 %v1345
        %v1437 = vunpack.c.l.b16 %v1346
        %v1438 = vunpack.c.h.b16 %v1346
        %v1439 = vunpack.c.l.b16 %v1347
        %v1440 = vunpack.c.h.b16 %v1347
        %v1441 = vunpack.c.l.b16 %v1348
        %v1442 = vunpack.c.h.b16 %v1348
        %v1443 = vunpack.c.l.b16 %v1349
        %v1444 = vunpack.c.h.b16 %v1349
        %v1445 = vunpack.c.l.b16 %v1350
        %v1446 = vunpack.c.h.b16 %v1350
        %v1447 = vpack.c.b16 %v1383, %v1383
        %v1448 = vpack.c.b16 %v1384, %v1384
        %v1449 = vpack.c.b16 %v1385, %v1385
        %v1450 = vpack.c.b16 %v1386, %v1386
        %v1451 = vpack.c.b16 %v1387, %v1387
        %v1452 = vpack.c.b16 %v1388, %v1388
        %v1453 = vpack.c.b16 %v1389, %v1389
        %v1454 = vpack.c.b16 %v1390, %v1390
        %v1455 = vpack.c.b16 %v1391, %v1391
        %v1456 = vpack.c.b16 %v1392, %v1392
        %v1457 = vpack.c.b16 %v1393, %v1393
        %v1458 = vpack.c.b16 %v1394, %v1394
        %v1459 = vpack.c.b16 %v1395, %v1395
        %v1460 = vpack.c.b16 %v1396, %v1396
        %v1461 = vpack.c.b16 %v1397, %v1397
        %v1462 = vpack.c.b16 %v1398, %v1398
        %v1463 = vpack.c.b16 %v1399, %v1399
        %v1464 = vpack.c.b16 %v1400, %v1400
        %v1465 = vpack.c.b16 %v1401, %v1401
        %v1466 = vpack.c.b16 %v1402, %v1402
        %v1467 = vpack.c.b16 %v1403, %v1403
        %v1468 = vpack.c.b16 %v1404, %v1404
        %v1469 = vpack.c.b16 %v1405, %v1405
        %v1470 = vpack.c.b16 %v1406, %v1406
        %v1471 = vpack.c.b16 %v1407, %v1407
        %v1472 = vpack.c.b16 %v1408, %v1408
        %v1473 = vpack.c.b16 %v1409, %v1409
        %v1474 = vpack.c.b16 %v1410, %v1410
        %v1475 = vpack.c.b16 %v1411, %v1411
        %v1476 = vpack.c.b16 %v1412, %v1412
        %v1477 = vpack.c.b16 %v1413, %v1413
        %v1478 = vpack.c.b16 %v1414, %v1414
        %v1479 = vpack.c.b16 %v1415, %v1415
        %v1480 = vpack.c.b16 %v1416, %v1416
        %v1481 = vpack.c.b16 %v1417, %v1417
        %v1482 = vpack.c.b16 %v1418, %v1418
        %v1483 = vpack.c.b16 %v1419, %v1419
        %v1484 = vpack.c.b16 %v1420, %v1420
        %v1485 = vpack.c.b16 %v1421, %v1421
        %v1486 = vpack.c.b16 %v1422, %v1422
        %v1487 = vpack.c.b16 %v1423, %v1423
        %v1488 = vpack.c.b16 %v1424, %v1424
        %v1489 = vpack.c.b16 %v1425, %v1425
        %v1490 = vpack.c.b16 %v1426, %v1426
        %v1491 = vpack.c.b16 %v1427, %v1427
        %v1492 = vpack.c.b16 %v1428, %v1428
        %v1493 = vpack.c.b16 %v1429, %v1429
        %v1494 = vpack.c.b16 %v1430, %v1430
        %v1495 = vpack.c.b16 %v1431, %v1431
        %v1496 = vpack.c.b16 %v1432, %v1432
        %v1497 = vpack.c.b16 %v1433, %v1433
        %v1498 = vpack.c.b16 %v1434, %v1434
        %v1499 = vpack.c.b16 %v1435, %v1435
        %v1500 = vpack.c.b16 %v1436, %v1436
        %v1501 = vpack.c.b16 %v1437, %v1437
        %v1502 = vpack.c.b16 %v1438, %v1438
        %v1503 = vpack.c.b16 %v1439, %v1439
        %v1504 = vpack.c.b16 %v1440, %v1440
        %v1505 = vpack.c.b16 %v1441, %v1441
        %v1506 = vpack.c.b16 %v1442, %v1442
        %v1507 = vpack.c.b16 %v1443, %v1443
        %v1508 = vpack.c.b16 %v1444, %v1444
        %v1509 = vpack.c.b16 %v1445, %v1445
        %v1510 = vpack.c.b16 %v1446, %v1446
        %1575 = vst [vmem:[%s306] sm:$0xf] %v1447
        %1576 = vst [vmem:[%s306 + $0x4] sm:$0xf] %v1448
        %1577 = vst [vmem:[%s306 + $0x8] sm:$0xf] %v1449
        %1578 = vst [vmem:[%s306 + $0xc] sm:$0xf] %v1450
        %1579 = vst [vmem:[%s306 + $0x10] sm:$0xf] %v1451
        %1580 = vst [vmem:[%s306 + $0x14] sm:$0xf] %v1452
        %1581 = vst [vmem:[%s306 + $0x18] sm:$0xf] %v1453
        %1582 = vst [vmem:[%s306 + $0x1c] sm:$0xf] %v1454
        %1583 = vst [vmem:[%s306 + $0x20] sm:$0xf] %v1455
        %1584 = vst [vmem:[%s306 + $0x24] sm:$0xf] %v1456
        %1585 = vst [vmem:[%s306 + $0x28] sm:$0xf] %v1457
        %1586 = vst [vmem:[%s306 + $0x2c] sm:$0xf] %v1458
        %1587 = vst [vmem:[%s306 + $0x30] sm:$0xf] %v1459
        %1588 = vst [vmem:[%s306 + $0x34] sm:$0xf] %v1460
        %1589 = vst [vmem:[%s306 + $0x38] sm:$0xf] %v1461
        %1590 = vst [vmem:[%s306 + $0x3c] sm:$0xf] %v1462
        %1591 = vst [vmem:[%s306 + $0x40] sm:$0xf] %v1463
        %1592 = vst [vmem:[%s306 + $0x44] sm:$0xf] %v1464
        %1593 = vst [vmem:[%s306 + $0x48] sm:$0xf] %v1465
        %1594 = vst [vmem:[%s306 + $0x4c] sm:$0xf] %v1466
        %1595 = vst [vmem:[%s306 + $0x50] sm:$0xf] %v1467
        %1596 = vst [vmem:[%s306 + $0x54] sm:$0xf] %v1468
        %1597 = vst [vmem:[%s306 + $0x58] sm:$0xf] %v1469
        %1598 = vst [vmem:[%s306 + $0x5c] sm:$0xf] %v1470
        %1599 = vst [vmem:[%s306 + $0x60] sm:$0xf] %v1471
        %1600 = vst [vmem:[%s306 + $0x64] sm:$0xf] %v1472
        %1601 = vst [vmem:[%s306 + $0x68] sm:$0xf] %v1473
        %1602 = vst [vmem:[%s306 + $0x6c] sm:$0xf] %v1474
        %1603 = vst [vmem:[%s306 + $0x70] sm:$0xf] %v1475
        %1604 = vst [vmem:[%s306 + $0x74] sm:$0xf] %v1476
        %1605 = vst [vmem:[%s306 + $0x78] sm:$0xf] %v1477
        %1606 = vst [vmem:[%s306 + $0x7c] sm:$0xf] %v1478
        %1607 = vst [vmem:[%s306 + $0x80] sm:$0xf] %v1479
        %1608 = vst [vmem:[%s306 + $0x84] sm:$0xf] %v1480
        %1609 = vst [vmem:[%s306 + $0x88] sm:$0xf] %v1481
        %1610 = vst [vmem:[%s306 + $0x8c] sm:$0xf] %v1482
        %1611 = vst [vmem:[%s306 + $0x90] sm:$0xf] %v1483
        %1612 = vst [vmem:[%s306 + $0x94] sm:$0xf] %v1484
        %1613 = vst [vmem:[%s306 + $0x98] sm:$0xf] %v1485
        %1614 = vst [vmem:[%s306 + $0x9c] sm:$0xf] %v1486
        %1615 = vst [vmem:[%s306 + $0xa0] sm:$0xf] %v1487
        %1616 = vst [vmem:[%s306 + $0xa4] sm:$0xf] %v1488
        %1617 = vst [vmem:[%s306 + $0xa8] sm:$0xf] %v1489
        %1618 = vst [vmem:[%s306 + $0xac] sm:$0xf] %v1490
        %1619 = vst [vmem:[%s306 + $0xb0] sm:$0xf] %v1491
        %1620 = vst [vmem:[%s306 + $0xb4] sm:$0xf] %v1492
        %1621 = vst [vmem:[%s306 + $0xb8] sm:$0xf] %v1493
        %1622 = vst [vmem:[%s306 + $0xbc] sm:$0xf] %v1494
        %1623 = vst [vmem:[%s306 + $0xc0] sm:$0xf] %v1495
        %1624 = vst [vmem:[%s306 + $0xc4] sm:$0xf] %v1496
        %1625 = vst [vmem:[%s306 + $0xc8] sm:$0xf] %v1497
        %1626 = vst [vmem:[%s306 + $0xcc] sm:$0xf] %v1498
        %1627 = vst [vmem:[%s306 + $0xd0] sm:$0xf] %v1499
        %1628 = vst [vmem:[%s306 + $0xd4] sm:$0xf] %v1500
        %1629 = vst [vmem:[%s306 + $0xd8] sm:$0xf] %v1501
        %1630 = vst [vmem:[%s306 + $0xdc] sm:$0xf] %v1502
        %1631 = vst [vmem:[%s306 + $0xe0] sm:$0xf] %v1503
        %1632 = vst [vmem:[%s306 + $0xe4] sm:$0xf] %v1504
        %1633 = vst [vmem:[%s306 + $0xe8] sm:$0xf] %v1505
        %1634 = vst [vmem:[%s306 + $0xec] sm:$0xf] %v1506
        %1635 = vst [vmem:[%s306 + $0xf0] sm:$0xf] %v1507
        %1636 = vst [vmem:[%s306 + $0xf4] sm:$0xf] %v1508
        %1637 = vst [vmem:[%s306 + $0xf8] sm:$0xf] %v1509
        %1638 = vst [vmem:[%s306 + $0xfc] sm:$0xf] %v1510
        %s1639 = sand.u32 %s160, 1
        %s1640 = scalar_lea.sflag [#allocation4], %s1639
        %s1641 = sand.u32 %s160, 1
        %s1642 = smul.addr %s1641, 256
        %s1643 = scalar_lea.vmem [#allocation10], %s1642
        // Predicated region
        $region53: #{tpu_custom_call.1} parent=35 // pred_check
          %p1644 = pneg %p170
        $region54: #{tpu_custom_call.1} parent=35 // pred_check_branch
          %1646 = sbr.rel (%p1644) target = $region56
        $region55: #{tpu_custom_call.1} parent=35 // pred_region
          %s1647 = smul.u32 64, %s28
          %s1649 = ssub.s32 4096, 4096
          %1650 = vsyncadd %s1640, %s1649
          %s1651 = sadd.s32 %s29, %s1647
          %s1652 = smul.addr %s1651, 64
          %s1653 = scalar_lea.hbm %s4, %s1652
          %s1654 = sshll.u32 %s1643, 4
          %s1655 = int_to_ptr.vmem [resolvable:$true] %s1654
          %1660 = dma.vmem_to_hbm [thread:$0]  %s1655, 4096, %s1653, %s1640, 64, 64, 4
        $region56: #{tpu_custom_call.1} parent=35 // pred_fallthru
          _
      $region36: #{tpu_custom_call.1} parent=5 // pred_fallthru
        _
      %p1661 = scmp.le.s32.totalorder 2, %s18
      // Predicated region
      $region57: #{tpu_custom_call.1} parent=5 // pred_check
        %p1662 = pneg %p1661
      $region58: #{tpu_custom_call.1} parent=5 // pred_check_branch
        %1664 = sbr.rel (%p1662) target = $region60
      $region59: #{tpu_custom_call.1} parent=5 // pred_region
        %s1665 = ssub.s32 %s18, 2
        // Predicated region
        $region61: #{tpu_custom_call.1} parent=59 // pred_check
          %p1666 = pneg %p176
        $region62: #{tpu_custom_call.1} parent=59 // pred_check_branch
          %1668 = sbr.rel (%p1666) target = $region64
        $region63: #{tpu_custom_call.1} parent=59 // pred_region
          %s1669 = sand.u32 %s161, 1
          %s1670 = scalar_lea.sflag [#allocation4], %s1669
          %s1671 = sand.u32 %s161, 1
          %s1672 = smul.addr %s1671, 256
          %s1673 = scalar_lea.vmem [#allocation10], %s1672
          %1674 = dma.done %s1670, 4096
        $region64: #{tpu_custom_call.1} parent=59 // pred_fallthru
          _
      $region60: #{tpu_custom_call.1} parent=5 // pred_fallthru
        _
    $region6: #{tpu_custom_call.1} parent=1 // loop_footer
      %s22 = sadd.s32 1, %s18
    $region7: #{tpu_custom_call.1} parent=1 // loop_footer_branch
      %17 = sbr.rel target = $region3
    $region8: #{tpu_custom_call.1} parent=1 // loop_exit
      _
    %1675 = vsyncpa [#allocation3], 1
    %s1676 = scalar_lea.sflag [#allocation3], 1
    %1677 = vsyncpa %s1676, 1
    %1678 = vsyncpa [#allocation6], 1
    %1679 = vsyncpa [#allocation9], 1
    %1680 = vsyncpa [#allocation4], 1
    %s1681 = scalar_lea.sflag [#allocation4], 1
    %1682 = vsyncpa %s1681, 1

</llo_original>
